<compile_context>
chip_gen: v7x
topology: tpu7x:2x2x1
jax: 0.10.0
libtpu: 0.0.40
codegen_flags: <defaults>
</compile_context>

<pallas_src>
import functools

import jax
import jax.numpy as jnp
from jax.experimental import pallas as pl
from jax.experimental.pallas import tpu as pltpu


MAX_TILE_N = 8192   # cap per-step batch tile (multiple of 128)


def _round_up(x, m):
    return -(-x // m) * m


def _choose_tile_n(n):
    """Static batch-tile size (multiple of 128).

    Fewer/larger tiles amortize the fixed per-grid-step overhead; targeting
    ~n/2 (capped at MAX_TILE_N) keeps >= 2 tiles whenever the batch allows it
    so v7x's two TensorCores both get work from the "parallel" grid axis,
    while bounding padding waste for small batches.
    """
    n128 = _round_up(max(int(n), 1), 128)
    if n128 <= 128:
        return 128
    half = _round_up(n128 // 2, 128)
    return min(MAX_TILE_N, half)


def _make_rnd_kernel(n_layers):
    """Fused f/f_hat forward, feature-major: activations are (width, tile_n).

    Ref order: x_t, (W0, b0, ..., W_{n_layers-1}, b_{n_layers-1}, Wd, bd), out.
    Weights are pre-transposed to (out_features, in_features) f32; biases are
    (out_features, 1) f32 columns.  The final "difference layer" (Wd, bd)
    directly produces pred - target; the per-column L2 norm is the output.
    """

    def kernel(*refs):
        x_ref = refs[0]
        param_refs = refs[1:-1]
        out_ref = refs[-1]

        h = x_ref[...]                                  # (ob_dim, tile_n) f32
        for l in range(n_layers):                       # fused hidden tanh layers
            w = param_refs[2 * l][...]                  # f32 (2*size, in)
            b = param_refs[2 * l + 1][...]              # f32 (2*size, 1)
            h = jnp.tanh(jnp.dot(w, h, preferred_element_type=jnp.float32) + b)
        wd = param_refs[2 * n_layers][...]              # f32 (out, 2*size)
        bd = param_refs[2 * n_layers + 1][...]          # f32 (out, 1)
        diff = jnp.dot(wd, h, preferred_element_type=jnp.float32) + bd  # pred - target
        # Per-column L2 norm -> lane-dense (1, tile_n) row (full unmasked vst).
        out_ref[...] = jnp.sqrt(jnp.sum(diff * diff, axis=0, keepdims=True))

    return kernel


def init_mlp_params(key, ob_dim, output_size, n_layers, size, method):
    """(W, b) pairs for n_layers hidden tanh layers + identity output layer."""
    dims = [ob_dim] + [size] * n_layers + [output_size]
    params = []
    for i in range(len(dims) - 1):
        key, kw, kb = jax.random.split(key, 3)
        if method == "uniform":       # init_method_1: .uniform_()
            w = jax.random.uniform(kw, (dims[i], dims[i + 1]), jnp.float32)
            b = jax.random.uniform(kb, (1, dims[i + 1]), jnp.float32)
        else:                         # init_method_2: .normal_()
            w = jax.random.normal(kw, (dims[i], dims[i + 1]), jnp.float32)
            b = jax.random.normal(kb, (1, dims[i + 1]), jnp.float32)
        params += [w, b]
    return params


def pack_rnd_params(f_params, f_hat_params, n_layers, compute_dtype=jnp.float32):
    """Fuse f and f_hat into one feature-major network that outputs pred - target.

    Done ONCE at setup (not per forward call).  Weights are transposed to
    (out_features, in_features); everything stays f32 to match the torch
    forward pass numerically.
    """
    packed = []
    for l in range(n_layers):
        wf, bf = f_params[2 * l], f_params[2 * l + 1]
        wh, bh = f_hat_params[2 * l], f_hat_params[2 * l + 1]
        if l == 0:
            w = jnp.concatenate([wf, wh], axis=1)                 # (ob_dim, 2*size)
        else:
            z = jnp.zeros_like(wf)
            w = jnp.block([[wf, z], [z, wh]])                     # (2*size, 2*size)
        b = jnp.concatenate([bf, bh], axis=1)                     # (1, 2*size)
        packed += [w.T.astype(compute_dtype), b.T.astype(jnp.float32)]
    # Output (identity-activation) layer folded into a single difference layer.
    wf, bf = f_params[2 * n_layers], f_params[2 * n_layers + 1]
    wh, bh = f_hat_params[2 * n_layers], f_hat_params[2 * n_layers + 1]
    wd = jnp.concatenate([-wf, wh], axis=0)                       # (2*size, out)
    bd = bh - bf                                                  # (1, out)
    packed += [wd.T.astype(compute_dtype), bd.T.astype(jnp.float32)]
    return tuple(packed)


@functools.partial(jax.jit, static_argnames=("n_layers",))
def rnd_forward(ob_no, packed_params, *, n_layers):
    n, ob_dim = ob_no.shape
    tile_n = _choose_tile_n(n)                    # static: shapes are static under jit
    n_pad = pl.cdiv(n, tile_n) * tile_n
    num_tiles = n_pad // tile_n

    # Feature-major activation stream (ob_dim, n_pad): batch on the lane axis.
    # Padded rows run through the net and are sliced off (finite; no NaN risk).
    x_t = jnp.pad(ob_no, ((0, n_pad - n), (0, 0))).T

    x_spec = pl.BlockSpec((ob_dim, tile_n), lambda i: (0, i))
    # Constant index_map -> parameters fetched once and stay VMEM-resident.
    param_specs = [pl.BlockSpec(p.shape, lambda i: (0, 0)) for p in packed_params]
    out_spec = pl.BlockSpec((1, tile_n), lambda i: (0, i))

    w_shapes = [p.shape for p in packed_params[0::2]]
    flops = 2 * n_pad * sum(s[0] * s[1] for s in w_shapes)
    transcendentals = n_pad * sum(w_shapes[l][0] for l in range(n_layers))
    bytes_accessed = 4 * n_pad * (ob_dim + 1) + sum(
        int(p.size) * p.dtype.itemsize for p in packed_params)

    out = pl.pallas_call(
        _make_rnd_kernel(n_layers),
        out_shape=jax.ShapeDtypeStruct((1, n_pad), jnp.float32),
        grid=(num_tiles,),
        in_specs=[x_spec] + param_specs,
        out_specs=out_spec,
        # Per-step VMEM (tile_n=8192 worst case): 2 x 512 KiB x-tile buffers +
        # ~46 KiB resident weights + 2 x 32 KiB output rows + f32 intermediates
        # -- comfortably under the default scoped VMEM limit on v5e/v6e/v7x.
        compiler_params=pltpu.CompilerParams(
            dimension_semantics=("parallel",)),   # shard tiles across v7x's 2 TCs
        cost_estimate=pl.CostEstimate(
            flops=int(flops),
            transcendentals=int(transcendentals),
            bytes_accessed=int(bytes_accessed)),
    )(x_t, *packed_params)
    return out[0, :n]   # (N,) -- matches LA.norm(pred - target, dim=1)


def rnd_forward_ref(ob_no, f_params, f_hat_params, n_layers):
    """Pure-JAX f32 reference (two separate, un-fused MLPs)."""
    num_linear = n_layers + 1

    def mlp(x, params):
        h = x
        for i in range(num_linear):
            w, b = params[2 * i], params[2 * i + 1]
            h = jnp.dot(h, w, precision=jax.lax.Precision.HIGHEST,
                        preferred_element_type=jnp.float32) + b
            if i < num_linear - 1:
                h = jnp.tanh(h)
        return h

    target = mlp(ob_no, f_params)    # .detach() in torch -- forward only here
    pred = mlp(ob_no, f_hat_params)
    return jnp.linalg.norm(pred - target, axis=1)


# TODO(synk): update()/optimizer/lr-scheduler (training step) are not part of the
# forward pass and are not implemented here.

if __name__ == "__main__":
    # Small hparams consistent with RNDModel.__init__.
    batch = 2000                 # -> tile_n=1024, 2 tiles: exercises grid + padding
    ob_dim = 16
    rnd_output_size = 8
    rnd_n_layers = 2
    rnd_size = 32

    key = jax.random.PRNGKey(0)
    k_x, k_f, k_fh = jax.random.split(key, 3)

    ob_no = jax.random.normal(k_x, (batch, ob_dim), jnp.float32)
    f_params = init_mlp_params(k_f, ob_dim, rnd_output_size, rnd_n_layers,
                               rnd_size, method="uniform")
    f_hat_params = init_mlp_params(k_fh, ob_dim, rnd_output_size, rnd_n_layers,
                                   rnd_size, method="normal")
    packed = pack_rnd_params(f_params, f_hat_params, rnd_n_layers)

    out = rnd_forward(ob_no, packed, n_layers=rnd_n_layers)
    out = jax.block_until_ready(out)
    assert out.shape == (batch,)
    assert bool(jnp.all(jnp.isfinite(out)))

    # Compare against the full-f32 reference.  Tolerance is scale-aware because
    # .uniform_()/.normal_() init drives the norms to O(30).
    ref = rnd_forward_ref(ob_no, f_params, f_hat_params, rnd_n_layers)
    max_abs_err = float(jnp.max(jnp.abs(out - ref)))
    tol = 1e-3 + 1e-2 * float(jnp.max(jnp.abs(ref)))
    assert max_abs_err <= tol, (max_abs_err, tol)

    print("KERNEL_OK")
</pallas_src>

<mosaic_0001>
module attributes {stable_mosaic.version = 11 : i64} {
  func.func @kernel(%arg0: i32, %arg1: memref<16x1024xf32, #tpu.memory_space<vmem>>, %arg2: memref<64x16xf32, #tpu.memory_space<vmem>>, %arg3: memref<64x1xf32, #tpu.memory_space<vmem>>, %arg4: memref<64x64xf32, #tpu.memory_space<vmem>>, %arg5: memref<64x1xf32, #tpu.memory_space<vmem>>, %arg6: memref<8x64xf32, #tpu.memory_space<vmem>>, %arg7: memref<8x1xf32, #tpu.memory_space<vmem>>, %arg8: memref<1x1024xf32, #tpu.memory_space<vmem>>) attributes {dimension_semantics = [#tpu.dimension_semantics<parallel>], iteration_bounds = array<i64: 2>, scalar_prefetch = 0 : i64, scratch_operands = 0 : i64, tpu.core_type = #tpu.core_type<tc>, window_params = [{transform_indices = @transform_0, window_bounds = array<i64: 16, 1024>}, {pipeline_mode = #tpu.pipeline_mode<synchronous>, transform_indices = @transform_1, window_bounds = array<i64: 64, 16>}, {pipeline_mode = #tpu.pipeline_mode<synchronous>, transform_indices = @transform_2, window_bounds = array<i64: 64, 1>}, {pipeline_mode = #tpu.pipeline_mode<synchronous>, transform_indices = @transform_3, window_bounds = array<i64: 64, 64>}, {pipeline_mode = #tpu.pipeline_mode<synchronous>, transform_indices = @transform_4, window_bounds = array<i64: 64, 1>}, {pipeline_mode = #tpu.pipeline_mode<synchronous>, transform_indices = @transform_5, window_bounds = array<i64: 8, 64>}, {pipeline_mode = #tpu.pipeline_mode<synchronous>, transform_indices = @transform_6, window_bounds = array<i64: 8, 1>}, {transform_indices = @transform_7, window_bounds = array<i64: 1, 1024>}]} {
    %c0 = arith.constant 0 : index
    %c0_0 = arith.constant 0 : index
    %0 = vector.load %arg1[%c0, %c0_0] : memref<16x1024xf32, #tpu.memory_space<vmem>>, vector<16x1024xf32>
    %c0_1 = arith.constant 0 : index
    %c0_2 = arith.constant 0 : index
    %1 = vector.load %arg2[%c0_1, %c0_2] : memref<64x16xf32, #tpu.memory_space<vmem>>, vector<64x16xf32>
    %c0_3 = arith.constant 0 : index
    %c0_4 = arith.constant 0 : index
    %2 = vector.load %arg3[%c0_3, %c0_4] : memref<64x1xf32, #tpu.memory_space<vmem>>, vector<64x1xf32>
    %cst = arith.constant dense<0.000000e+00> : vector<64x1024xf32>
    %3 = tpu.matmul %1, %0, %cst {dimension_numbers = #tpu.dot_dimension_numbers<[1], [0], [0], [1], [0, 0, 1, 1], [], []>} : vector<64x16xf32>, vector<16x1024xf32>, vector<64x1024xf32> -> vector<64x1024xf32>
    %4 = vector.broadcast %2 : vector<64x1xf32> to vector<64x1024xf32>
    %5 = arith.addf %3, %4 : vector<64x1024xf32>
    %6 = math.tanh %5 : vector<64x1024xf32>
    %c0_5 = arith.constant 0 : index
    %c0_6 = arith.constant 0 : index
    %7 = vector.load %arg4[%c0_5, %c0_6] : memref<64x64xf32, #tpu.memory_space<vmem>>, vector<64x64xf32>
    %c0_7 = arith.constant 0 : index
    %c0_8 = arith.constant 0 : index
    %8 = vector.load %arg5[%c0_7, %c0_8] : memref<64x1xf32, #tpu.memory_space<vmem>>, vector<64x1xf32>
    %cst_9 = arith.constant dense<0.000000e+00> : vector<64x1024xf32>
    %9 = tpu.matmul %7, %6, %cst_9 {dimension_numbers = #tpu.dot_dimension_numbers<[1], [0], [0], [1], [0, 0, 1, 1], [], []>} : vector<64x64xf32>, vector<64x1024xf32>, vector<64x1024xf32> -> vector<64x1024xf32>
    %10 = vector.broadcast %8 : vector<64x1xf32> to vector<64x1024xf32>
    %11 = arith.addf %9, %10 : vector<64x1024xf32>
    %12 = math.tanh %11 : vector<64x1024xf32>
    %c0_10 = arith.constant 0 : index
    %c0_11 = arith.constant 0 : index
    %13 = vector.load %arg6[%c0_10, %c0_11] : memref<8x64xf32, #tpu.memory_space<vmem>>, vector<8x64xf32>
    %c0_12 = arith.constant 0 : index
    %c0_13 = arith.constant 0 : index
    %14 = vector.load %arg7[%c0_12, %c0_13] : memref<8x1xf32, #tpu.memory_space<vmem>>, vector<8x1xf32>
    %cst_14 = arith.constant dense<0.000000e+00> : vector<8x1024xf32>
    %15 = tpu.matmul %13, %12, %cst_14 {dimension_numbers = #tpu.dot_dimension_numbers<[1], [0], [0], [1], [0, 0, 1, 1], [], []>} : vector<8x64xf32>, vector<64x1024xf32>, vector<8x1024xf32> -> vector<8x1024xf32>
    %16 = vector.broadcast %14 : vector<8x1xf32> to vector<8x1024xf32>
    %17 = arith.addf %15, %16 : vector<8x1024xf32>
    %18 = arith.mulf %17, %17 : vector<8x1024xf32>
    %cst_15 = arith.constant dense<0.000000e+00> : vector<1024xf32>
    %19 = vector.multi_reduction <add>, %18, %cst_15 [0] : vector<8x1024xf32> to vector<1024xf32>
    %20 = vector.shape_cast %19 : vector<1024xf32> to vector<1x1024xf32>
    %21 = math.sqrt %20 : vector<1x1024xf32>
    %c0_16 = arith.constant 0 : index
    %c0_17 = arith.constant 0 : index
    %22 = vector.load %arg8[%c0_16, %c0_17] : memref<1x1024xf32, #tpu.memory_space<vmem>>, vector<1x1024xf32>
    tpu.vector_store %arg8[%c0_16, %c0_17], %21 {strides = array<i32>} : memref<1x1024xf32, #tpu.memory_space<vmem>>, vector<1x1024xf32>,
    return
  }
  func.func @transform_0(%arg0: i32) -> (i32, i32) {
    %c0_i32 = arith.constant 0 : i32
    %c0_i32_0 = arith.constant 0 : i32
    return %c0_i32, %arg0 : i32, i32
  }
  func.func @transform_1(%arg0: i32) -> (i32, i32) {
    %c0_i32 = arith.constant 0 : i32
    %c0_i32_0 = arith.constant 0 : i32
    %c0_i32_1 = arith.constant 0 : i32
    return %c0_i32, %c0_i32_0 : i32, i32
  }
  func.func @transform_2(%arg0: i32) -> (i32, i32) {
    %c0_i32 = arith.constant 0 : i32
    %c0_i32_0 = arith.constant 0 : i32
    %c0_i32_1 = arith.constant 0 : i32
    return %c0_i32, %c0_i32_0 : i32, i32
  }
  func.func @transform_3(%arg0: i32) -> (i32, i32) {
    %c0_i32 = arith.constant 0 : i32
    %c0_i32_0 = arith.constant 0 : i32
    %c0_i32_1 = arith.constant 0 : i32
    return %c0_i32, %c0_i32_0 : i32, i32
  }
  func.func @transform_4(%arg0: i32) -> (i32, i32) {
    %c0_i32 = arith.constant 0 : i32
    %c0_i32_0 = arith.constant 0 : i32
    %c0_i32_1 = arith.constant 0 : i32
    return %c0_i32, %c0_i32_0 : i32, i32
  }
  func.func @transform_5(%arg0: i32) -> (i32, i32) {
    %c0_i32 = arith.constant 0 : i32
    %c0_i32_0 = arith.constant 0 : i32
    %c0_i32_1 = arith.constant 0 : i32
    return %c0_i32, %c0_i32_0 : i32, i32
  }
  func.func @transform_6(%arg0: i32) -> (i32, i32) {
    %c0_i32 = arith.constant 0 : i32
    %c0_i32_0 = arith.constant 0 : i32
    %c0_i32_1 = arith.constant 0 : i32
    return %c0_i32, %c0_i32_0 : i32, i32
  }
  func.func @transform_7(%arg0: i32) -> (i32, i32) {
    %c0_i32 = arith.constant 0 : i32
    %c0_i32_0 = arith.constant 0 : i32
    return %c0_i32, %arg0 : i32, i32
  }
}

</mosaic_0001>

<llo_original>
// kernel: rnd_forward.1
$region0: #{rnd_forward.1}
  #allocation0 [shape = 'u32[]', space=smem, size = 0x4, offset = 0x4, fixed_abs, tag = 'smem constant byte address 0x4 - core index']
  #allocation1 [shape = 'u32[144,128]{1,0:T(1,128)}', space=vmem, size = 0x12000, scoped, tag = 'internal scratch']
  %s0 = inlined_call_operand.vmem [shape: f32[16,2048], index: 0, kind: input, shape index: {}]
  %s1 = inlined_call_operand.vmem [shape: f32[64,16], index: 1, kind: input, shape index: {}]
  %s2 = inlined_call_operand.vmem [shape: f32[64,1], index: 2, kind: input, shape index: {}]
  %s3 = inlined_call_operand.vmem [shape: f32[64,64], index: 3, kind: input, shape index: {}]
  %s4 = inlined_call_operand.vmem [shape: f32[64,1], index: 4, kind: input, shape index: {}]
  %s5 = inlined_call_operand.vmem [shape: f32[8,64], index: 5, kind: input, shape index: {}]
  %s6 = inlined_call_operand.vmem [shape: f32[8,1], index: 6, kind: input, shape index: {}]
  %s7 = inlined_call_operand.hbm [shape: f32[1,2048], index: 7, kind: output, shape index: {}]
  %s8 = sld [smem:[#allocation0]]
  $region84: #{rnd_forward.1} parent=0
    _
  %s10 = ssub.s32 1, %s8
  %s11 = scalar_select 0, %s10, %s8
  $region1: #{rnd_forward.1} parent=0
    #allocation2 [shape = 'u8[131072]{0}', space=vmem, size = 0x20000, scoped, tag = 'input window, operand 0']
    #allocation3 [shape = 'u8[8192]{0}', space=vmem, size = 0x2000, scoped, tag = 'output window, operand 0']
    #allocation4 [shape = 's32[2]{0}', space=sflag, size = 0x8, scoped, tag = 'scoped memory for rnd_forward.1']
    %12 = vsyncpa [#allocation4], 0
    %s13 = scalar_lea.sflag [#allocation4], 1
    %14 = vsyncpa %s13, 0
    loop: start=0, step=1, limit=4
    $region2: #{rnd_forward.1} parent=1 // loop_pre_header
      _
    $region3: #{rnd_forward.1} parent=1 // loop_header
      %s16 = sphi 0, %s20
      %p17 = scmp.ge.s32.totalorder %s16, 4
      %s26 = sphi 0, %s28
      %s29 = sphi 0, %s26
      %s30 = sphi 0, %s29
      %s46 = sphi 0, %s30
      %s50 = sphi 0, %s50
      %s52 = sphi 0, %s50
      %s53 = sphi 0, %s52
      %s67 = sphi 0, %s53
      %s71 = sphi 0, %s71
      %s73 = sphi 0, %s71
      %s74 = sphi 0, %s73
      %s88 = sphi 0, %s74
      %s92 = sphi 0, %s92
      %s94 = sphi 0, %s92
      %s95 = sphi 0, %s94
      %s109 = sphi 0, %s95
      %s113 = sphi 0, %s113
      %s115 = sphi 0, %s113
      %s116 = sphi 0, %s115
      %s130 = sphi 0, %s116
      %s134 = sphi 0, %s134
      %s136 = sphi 0, %s134
      %s137 = sphi 0, %s136
      %s151 = sphi 0, %s137
      %s155 = sphi 0, %s155
      %s157 = sphi 0, %s155
      %s158 = sphi 0, %s157
      %s172 = sphi 0, %s158
      %s178 = sphi 0, %s180
      %s181 = sphi 0, %s178
      %s182 = sphi 0, %s181
      %s198 = sphi 0, %s182
    $region4: #{rnd_forward.1} parent=1 // loop_header_branch
      %19 = sbr.rel (%p17) target = $region8
    $region5: #{rnd_forward.1} parent=1 // loop_body
      %s21 = ssub.s32 %s16, 1
      %s22 = ssub.s32 %s16, 2
      %s23 = sadd.s32 %s16, 1
      %s24 = ssub.s32 %s16, %s23
      %p25 = scmp.eq.s32.totalorder %s24, 0
      %s27 = sadd.s32 %s26, 1
      %s28 = scalar_select %p25, %s26, %s27
      %p31 = pneg %p25
      %p32 = scmp.eq.s32.totalorder %s16, 1
      %p33 = por %p31, %p32
      %p34 = scmp.ne.s32.totalorder %s26, %s29
      %p35 = scmp.eq.s32.totalorder %s16, 0
      %p36 = por %p34, %p35
      %p37 = scmp.ne.s32.totalorder %s26, %s29
      %p38 = scmp.eq.s32.totalorder %s21, 1
      %p39 = por %p37, %p38
      %p40 = scmp.ne.s32.totalorder %s29, %s30
      %p41 = scmp.eq.s32.totalorder %s21, 0
      %p42 = por %p40, %p41
      %p43 = scmp.ne.s32.totalorder %s29, %s30
      %p44 = scmp.eq.s32.totalorder %s22, 1
      %p45 = por %p43, %p44
      %p47 = scmp.ne.s32.totalorder %s30, %s46
      %p48 = scmp.eq.s32.totalorder %s22, 0
      %p49 = por %p47, %p48
      %s51 = sadd.s32 %s50, 1
      %p54 = scmp.eq.s32.totalorder %s16, 1
      %p55 = scmp.ne.s32.totalorder %s50, %s52
      %p56 = scmp.eq.s32.totalorder %s16, 0
      %p57 = por %p55, %p56
      %p58 = scmp.ne.s32.totalorder %s50, %s52
      %p59 = scmp.eq.s32.totalorder %s21, 1
      %p60 = por %p58, %p59
      %p61 = scmp.ne.s32.totalorder %s52, %s53
      %p62 = scmp.eq.s32.totalorder %s21, 0
      %p63 = por %p61, %p62
      %p64 = scmp.ne.s32.totalorder %s52, %s53
      %p65 = scmp.eq.s32.totalorder %s22, 1
      %p66 = por %p64, %p65
      %p68 = scmp.ne.s32.totalorder %s53, %s67
      %p69 = scmp.eq.s32.totalorder %s22, 0
      %p70 = por %p68, %p69
      %s72 = sadd.s32 %s71, 1
      %p75 = scmp.eq.s32.totalorder %s16, 1
      %p76 = scmp.ne.s32.totalorder %s71, %s73
      %p77 = scmp.eq.s32.totalorder %s16, 0
      %p78 = por %p76, %p77
      %p79 = scmp.ne.s32.totalorder %s71, %s73
      %p80 = scmp.eq.s32.totalorder %s21, 1
      %p81 = por %p79, %p80
      %p82 = scmp.ne.s32.totalorder %s73, %s74
      %p83 = scmp.eq.s32.totalorder %s21, 0
      %p84 = por %p82, %p83
      %p85 = scmp.ne.s32.totalorder %s73, %s74
      %p86 = scmp.eq.s32.totalorder %s22, 1
      %p87 = por %p85, %p86
      %p89 = scmp.ne.s32.totalorder %s74, %s88
      %p90 = scmp.eq.s32.totalorder %s22, 0
      %p91 = por %p89, %p90
      %s93 = sadd.s32 %s92, 1
      %p96 = scmp.eq.s32.totalorder %s16, 1
      %p97 = scmp.ne.s32.totalorder %s92, %s94
      %p98 = scmp.eq.s32.totalorder %s16, 0
      %p99 = por %p97, %p98
      %p100 = scmp.ne.s32.totalorder %s92, %s94
      %p101 = scmp.eq.s32.totalorder %s21, 1
      %p102 = por %p100, %p101
      %p103 = scmp.ne.s32.totalorder %s94, %s95
      %p104 = scmp.eq.s32.totalorder %s21, 0
      %p105 = por %p103, %p104
      %p106 = scmp.ne.s32.totalorder %s94, %s95
      %p107 = scmp.eq.s32.totalorder %s22, 1
      %p108 = por %p106, %p107
      %p110 = scmp.ne.s32.totalorder %s95, %s109
      %p111 = scmp.eq.s32.totalorder %s22, 0
      %p112 = por %p110, %p111
      %s114 = sadd.s32 %s113, 1
      %p117 = scmp.eq.s32.totalorder %s16, 1
      %p118 = scmp.ne.s32.totalorder %s113, %s115
      %p119 = scmp.eq.s32.totalorder %s16, 0
      %p120 = por %p118, %p119
      %p121 = scmp.ne.s32.totalorder %s113, %s115
      %p122 = scmp.eq.s32.totalorder %s21, 1
      %p123 = por %p121, %p122
      %p124 = scmp.ne.s32.totalorder %s115, %s116
      %p125 = scmp.eq.s32.totalorder %s21, 0
      %p126 = por %p124, %p125
      %p127 = scmp.ne.s32.totalorder %s115, %s116
      %p128 = scmp.eq.s32.totalorder %s22, 1
      %p129 = por %p127, %p128
      %p131 = scmp.ne.s32.totalorder %s116, %s130
      %p132 = scmp.eq.s32.totalorder %s22, 0
      %p133 = por %p131, %p132
      %s135 = sadd.s32 %s134, 1
      %p138 = scmp.eq.s32.totalorder %s16, 1
      %p139 = scmp.ne.s32.totalorder %s134, %s136
      %p140 = scmp.eq.s32.totalorder %s16, 0
      %p141 = por %p139, %p140
      %p142 = scmp.ne.s32.totalorder %s134, %s136
      %p143 = scmp.eq.s32.totalorder %s21, 1
      %p144 = por %p142, %p143
      %p145 = scmp.ne.s32.totalorder %s136, %s137
      %p146 = scmp.eq.s32.totalorder %s21, 0
      %p147 = por %p145, %p146
      %p148 = scmp.ne.s32.totalorder %s136, %s137
      %p149 = scmp.eq.s32.totalorder %s22, 1
      %p150 = por %p148, %p149
      %p152 = scmp.ne.s32.totalorder %s137, %s151
      %p153 = scmp.eq.s32.totalorder %s22, 0
      %p154 = por %p152, %p153
      %s156 = sadd.s32 %s155, 1
      %p159 = scmp.eq.s32.totalorder %s16, 1
      %p160 = scmp.ne.s32.totalorder %s155, %s157
      %p161 = scmp.eq.s32.totalorder %s16, 0
      %p162 = por %p160, %p161
      %p163 = scmp.ne.s32.totalorder %s155, %s157
      %p164 = scmp.eq.s32.totalorder %s21, 1
      %p165 = por %p163, %p164
      %p166 = scmp.ne.s32.totalorder %s157, %s158
      %p167 = scmp.eq.s32.totalorder %s21, 0
      %p168 = por %p166, %p167
      %p169 = scmp.ne.s32.totalorder %s157, %s158
      %p170 = scmp.eq.s32.totalorder %s22, 1
      %p171 = por %p169, %p170
      %p173 = scmp.ne.s32.totalorder %s158, %s172
      %p174 = scmp.eq.s32.totalorder %s22, 0
      %p175 = por %p173, %p174
      %s176 = ssub.s32 %s16, %s23
      %p177 = scmp.eq.s32.totalorder %s176, 0
      %s179 = sadd.s32 %s178, 1
      %s180 = scalar_select %p177, %s178, %s179
      %p183 = pneg %p177
      %p184 = scmp.eq.s32.totalorder %s16, 1
      %p185 = por %p183, %p184
      %p186 = scmp.ne.s32.totalorder %s178, %s181
      %p187 = scmp.eq.s32.totalorder %s16, 0
      %p188 = por %p186, %p187
      %p189 = scmp.ne.s32.totalorder %s178, %s181
      %p190 = scmp.eq.s32.totalorder %s21, 1
      %p191 = por %p189, %p190
      %p192 = scmp.ne.s32.totalorder %s181, %s182
      %p193 = scmp.eq.s32.totalorder %s21, 0
      %p194 = por %p192, %p193
      %p195 = scmp.ne.s32.totalorder %s181, %s182
      %p196 = scmp.eq.s32.totalorder %s22, 1
      %p197 = por %p195, %p196
      %p199 = scmp.ne.s32.totalorder %s182, %s198
      %p200 = scmp.eq.s32.totalorder %s22, 0
      %p201 = por %p199, %p200
      %p202 = scmp.le.s32.totalorder 1, %s16
      %p203 = scmp.lt.s32.totalorder %s16, 3
      %p204 = pnand %p202, %p203
      %p205 = pneg %p204
      // Predicated region
      $region9: #{rnd_forward.1} parent=5 // pred_check
        _
      $region10: #{rnd_forward.1} parent=5 // pred_check_branch
        %207 = sbr.rel (%p204) target = $region12
      $region11: #{rnd_forward.1} parent=5 // pred_region
        %s208 = ssub.s32 %s16, 1
        // Predicated region
        $region13: #{rnd_forward.1} parent=11 // pred_check
          %p209 = pneg %p63
        $region14: #{rnd_forward.1} parent=11 // pred_check_branch
          %211 = sbr.rel (%p209) target = $region16
        $region15: #{rnd_forward.1} parent=11 // pred_region
          _
        $region16: #{rnd_forward.1} parent=11 // pred_fallthru
          _
        // Predicated region
        $region17: #{rnd_forward.1} parent=11 // pred_check
          %p212 = pneg %p84
        $region18: #{rnd_forward.1} parent=11 // pred_check_branch
          %214 = sbr.rel (%p212) target = $region20
        $region19: #{rnd_forward.1} parent=11 // pred_region
          _
        $region20: #{rnd_forward.1} parent=11 // pred_fallthru
          _
        // Predicated region
        $region21: #{rnd_forward.1} parent=11 // pred_check
          %p215 = pneg %p105
        $region22: #{rnd_forward.1} parent=11 // pred_check_branch
          %217 = sbr.rel (%p215) target = $region24
        $region23: #{rnd_forward.1} parent=11 // pred_region
          _
        $region24: #{rnd_forward.1} parent=11 // pred_fallthru
          _
        // Predicated region
        $region25: #{rnd_forward.1} parent=11 // pred_check
          %p218 = pneg %p126
        $region26: #{rnd_forward.1} parent=11 // pred_check_branch
          %220 = sbr.rel (%p218) target = $region28
        $region27: #{rnd_forward.1} parent=11 // pred_region
          _
        $region28: #{rnd_forward.1} parent=11 // pred_fallthru
          _
        // Predicated region
        $region29: #{rnd_forward.1} parent=11 // pred_check
          %p221 = pneg %p147
        $region30: #{rnd_forward.1} parent=11 // pred_check_branch
          %223 = sbr.rel (%p221) target = $region32
        $region31: #{rnd_forward.1} parent=11 // pred_region
          _
        $region32: #{rnd_forward.1} parent=11 // pred_fallthru
          _
        // Predicated region
        $region33: #{rnd_forward.1} parent=11 // pred_check
          %p224 = pneg %p168
        $region34: #{rnd_forward.1} parent=11 // pred_check_branch
          %226 = sbr.rel (%p224) target = $region36
        $region35: #{rnd_forward.1} parent=11 // pred_region
          _
        $region36: #{rnd_forward.1} parent=11 // pred_fallthru
          _
      $region12: #{rnd_forward.1} parent=5 // pred_fallthru
        _
      %p227 = scmp.lt.s32.totalorder %s16, 2
      // Predicated region
      $region37: #{rnd_forward.1} parent=5 // pred_check
        %p228 = pneg %p227
      $region38: #{rnd_forward.1} parent=5 // pred_check_branch
        %230 = sbr.rel (%p228) target = $region40
      $region39: #{rnd_forward.1} parent=5 // pred_region
        // Predicated region
        $region41: #{rnd_forward.1} parent=39 // pred_check
          %p231 = pneg %p36
        $region42: #{rnd_forward.1} parent=39 // pred_check_branch
          %233 = sbr.rel (%p231) target = $region44
        $region43: #{rnd_forward.1} parent=39 // pred_region
          %s234 = sand.u32 %s26, 1
          %s235 = sand.u32 %s26, 1
          %s236 = smul.addr %s235, 128
          %s237 = scalar_lea.vmem [#allocation2], %s236
          %s238 = smul.u32 8, %s16
          %s239 = smul.addr %s238, 8
          %s240 = scalar_lea.vmem %s0, %s239
          // Predicated region
          $region45: #{rnd_forward.1} parent=43 // pred_check
            _
          $region46: #{rnd_forward.1} parent=43 // pred_check_branch
            %242 = sbr.rel (0) target = $region48
          $region47: #{rnd_forward.1} parent=43 // pred_region
            // Predicated region
            $region49: #{rnd_forward.1} parent=47 // pred_check
              _
            $region50: #{rnd_forward.1} parent=47 // pred_check_branch
              %244 = sbr.rel (0) target = $region52
            $region51: #{rnd_forward.1} parent=47 // pred_region
              loop: start=0, step=1, limit=1
              $region53: #{rnd_forward.1} parent=51 // loop_pre_header
                _
              $region54: #{rnd_forward.1} parent=51 // loop_header
                %s246 = sphi 0, %s250
                %p247 = scmp.ge.s32.totalorder %s246, 1
                %s251 = sphi %s240, %s240
                %s252 = sphi %s237, %s237
              $region55: #{rnd_forward.1} parent=51 // loop_header_branch
                %249 = sbr.rel (%p247) target = $region59
              $region56: #{rnd_forward.1} parent=51 // loop_body
                %v253 = vld [vmem:[%s251] sm:$0xff]
                %254 = vst [vmem:[%s252] sm:$0xff] %v253
                %v255 = vld [vmem:[%s251 + $0x8] sm:$0xff]
                %256 = vst [vmem:[%s252 + $0x8] sm:$0xff] %v255
                %v257 = vld [vmem:[%s251 + $0x10] sm:$0xff]
                %258 = vst [vmem:[%s252 + $0x10] sm:$0xff] %v257
                %v259 = vld [vmem:[%s251 + $0x18] sm:$0xff]
                %260 = vst [vmem:[%s252 + $0x18] sm:$0xff] %v259
                %v261 = vld [vmem:[%s251 + $0x20] sm:$0xff]
                %262 = vst [vmem:[%s252 + $0x20] sm:$0xff] %v261
                %v263 = vld [vmem:[%s251 + $0x28] sm:$0xff]
                %264 = vst [vmem:[%s252 + $0x28] sm:$0xff] %v263
                %v265 = vld [vmem:[%s251 + $0x30] sm:$0xff]
                %266 = vst [vmem:[%s252 + $0x30] sm:$0xff] %v265
                %v267 = vld [vmem:[%s251 + $0x38] sm:$0xff]
                %268 = vst [vmem:[%s252 + $0x38] sm:$0xff] %v267
                %v269 = vld [vmem:[%s251 + $0x80] sm:$0xff]
                %270 = vst [vmem:[%s252 + $0x40] sm:$0xff] %v269
                %v271 = vld [vmem:[%s251 + $0x88] sm:$0xff]
                %272 = vst [vmem:[%s252 + $0x48] sm:$0xff] %v271
                %v273 = vld [vmem:[%s251 + $0x90] sm:$0xff]
                %274 = vst [vmem:[%s252 + $0x50] sm:$0xff] %v273
                %v275 = vld [vmem:[%s251 + $0x98] sm:$0xff]
                %276 = vst [vmem:[%s252 + $0x58] sm:$0xff] %v275
                %v277 = vld [vmem:[%s251 + $0xa0] sm:$0xff]
                %278 = vst [vmem:[%s252 + $0x60] sm:$0xff] %v277
                %v279 = vld [vmem:[%s251 + $0xa8] sm:$0xff]
                %280 = vst [vmem:[%s252 + $0x68] sm:$0xff] %v279
                %v281 = vld [vmem:[%s251 + $0xb0] sm:$0xff]
                %282 = vst [vmem:[%s252 + $0x70] sm:$0xff] %v281
                %v283 = vld [vmem:[%s251 + $0xb8] sm:$0xff]
                %284 = vst [vmem:[%s252 + $0x78] sm:$0xff] %v283
              $region57: #{rnd_forward.1} parent=51 // loop_footer
                %s250 = sadd.s32 1, %s246
              $region58: #{rnd_forward.1} parent=51 // loop_footer_branch
                %245 = sbr.rel target = $region54
              $region59: #{rnd_forward.1} parent=51 // loop_exit
                _
            $region52: #{rnd_forward.1} parent=47 // pred_fallthru
              _
            // Predicated region
            $region60: #{rnd_forward.1} parent=47 // pred_check
              _
            $region61: #{rnd_forward.1} parent=47 // pred_check_branch
              %286 = sbr.rel target = $region63
            $region62: #{rnd_forward.1} parent=47 // pred_region
              _
            $region63: #{rnd_forward.1} parent=47 // pred_fallthru
              _
          $region48: #{rnd_forward.1} parent=43 // pred_fallthru
            _
          %287 = vnop
        $region44: #{rnd_forward.1} parent=39 // pred_fallthru
          _
      $region40: #{rnd_forward.1} parent=5 // pred_fallthru
        _
      %p288 = scmp.le.s32.totalorder 1, %s16
      %p289 = scmp.lt.s32.totalorder %s16, 3
      %p290 = pnand %p288, %p289
      %p291 = pneg %p290
      // Predicated region
      $region64: #{rnd_forward.1} parent=5 // pred_check
        _
      $region65: #{rnd_forward.1} parent=5 // pred_check_branch
        %293 = sbr.rel (%p290) target = $region67
      $region66: #{rnd_forward.1} parent=5 // pred_region
        %s294 = ssub.s32 %s16, 1
        %s295 = sand.u32 %s29, 1
        %s296 = sand.u32 %s29, 1
        %s297 = smul.addr %s296, 128
        %s298 = scalar_lea.vmem [#allocation2], %s297
        // Predicated region
        $region68: #{rnd_forward.1} parent=66 // pred_check
          %p299 = pneg %p42
        $region69: #{rnd_forward.1} parent=66 // pred_check_branch
          %301 = sbr.rel (%p299) target = $region71
        $region70: #{rnd_forward.1} parent=66 // pred_region
          _
        $region71: #{rnd_forward.1} parent=66 // pred_fallthru
          _
        %s302 = sand.u32 %s29, 1
        %s303 = sand.u32 %s29, 1
        %s304 = smul.addr %s303, 128
        %s305 = scalar_lea.vmem [#allocation2], %s304
        %p306 = pneg %p42
        %p307 = pneg %p39
        %p308 = pneg %p63
        %p309 = pneg %p60
        %p310 = pneg %p84
        %p311 = pneg %p81
        %p312 = pneg %p105
        %p313 = pneg %p102
        %p314 = pneg %p126
        %p315 = pneg %p123
        %p316 = pneg %p147
        %p317 = pneg %p144
        %p318 = pneg %p168
        %p319 = pneg %p165
        %p320 = pneg %p194
        %p321 = pneg %p191
        %s322 = sand.u32 %s181, 1
        %s323 = scalar_lea.sflag [#allocation4], %s322
        %s324 = sand.u32 %s181, 1
        %s325 = smul.addr %s324, 8
        %s326 = scalar_lea.vmem [#allocation3], %s325
        %s327 = smul.u32 8, %s21
        %s328 = smul.u32 8, %s21
        %v329 = vld [vmem:[%s298] sm:$0xff]
        %v330 = vld [vmem:[%s298 + $0x8] sm:$0xff]
        %v331 = vld [vmem:[%s298 + $0x10] sm:$0xff]
        %v332 = vld [vmem:[%s298 + $0x18] sm:$0xff]
        %v333 = vld [vmem:[%s298 + $0x20] sm:$0xff]
        %v334 = vld [vmem:[%s298 + $0x28] sm:$0xff]
        %v335 = vld [vmem:[%s298 + $0x30] sm:$0xff]
        %v336 = vld [vmem:[%s298 + $0x38] sm:$0xff]
        %v337 = vld [vmem:[%s298 + $0x40] sm:$0xff]
        %v338 = vld [vmem:[%s298 + $0x48] sm:$0xff]
        %v339 = vld [vmem:[%s298 + $0x50] sm:$0xff]
        %v340 = vld [vmem:[%s298 + $0x58] sm:$0xff]
        %v341 = vld [vmem:[%s298 + $0x60] sm:$0xff]
        %v342 = vld [vmem:[%s298 + $0x68] sm:$0xff]
        %v343 = vld [vmem:[%s298 + $0x70] sm:$0xff]
        %v344 = vld [vmem:[%s298 + $0x78] sm:$0xff]
        %v345 = vld [vmem:[%s1] sm:$0xff]
        %v346 = vld [vmem:[%s1 + $0x8] sm:$0xff]
        %v347 = vld [vmem:[%s1 + $0x10] sm:$0xff]
        %v348 = vld [vmem:[%s1 + $0x18] sm:$0xff]
        %v349 = vld [vmem:[%s1 + $0x20] sm:$0xff]
        %v350 = vld [vmem:[%s1 + $0x28] sm:$0xff]
        %v351 = vld [vmem:[%s1 + $0x30] sm:$0xff]
        %v352 = vld [vmem:[%s1 + $0x38] sm:$0xff]
        %v353 = vld [vmem:[%s2] sm:$0xff]
        %v354 = vld [vmem:[%s2 + $0x8] sm:$0xff]
        %v355 = vld [vmem:[%s2 + $0x10] sm:$0xff]
        %v356 = vld [vmem:[%s2 + $0x18] sm:$0xff]
        %v357 = vld [vmem:[%s2 + $0x20] sm:$0xff]
        %v358 = vld [vmem:[%s2 + $0x28] sm:$0xff]
        %v359 = vld [vmem:[%s2 + $0x30] sm:$0xff]
        %v360 = vld [vmem:[%s2 + $0x38] sm:$0xff]
        %362 = vset.pattern.permute.xlu0 0
        %363 = vperm.xlu0 %362, %v353
        %v364 = vpop.permute.xlu0 %363
        %367 = vset.pattern.permute.xlu0 0
        %368 = vperm.xlu0 %367, %v354
        %v369 = vpop.permute.xlu0 %368
        %372 = vset.pattern.permute.xlu0 0
        %373 = vperm.xlu0 %372, %v355
        %v374 = vpop.permute.xlu0 %373
        %377 = vset.pattern.permute.xlu0 0
        %378 = vperm.xlu0 %377, %v356
        %v379 = vpop.permute.xlu0 %378
        %382 = vset.pattern.permute.xlu0 0
        %383 = vperm.xlu0 %382, %v357
        %v384 = vpop.permute.xlu0 %383
        %387 = vset.pattern.permute.xlu0 0
        %388 = vperm.xlu0 %387, %v358
        %v389 = vpop.permute.xlu0 %388
        %392 = vset.pattern.permute.xlu0 0
        %393 = vperm.xlu0 %392, %v359
        %v394 = vpop.permute.xlu0 %393
        %397 = vset.pattern.permute.xlu0 0
        %398 = vperm.xlu0 %397, %v360
        %v399 = vpop.permute.xlu0 %398
        %vm401 = vcmask 130048
        %v403 = vsel %vm401, %v345, 0
        %v406 = vsel %vm401, %v346, 0
        %v409 = vsel %vm401, %v347, 0
        %v412 = vsel %vm401, %v348, 0
        %v415 = vsel %vm401, %v349, 0
        %v418 = vsel %vm401, %v350, 0
        %v421 = vsel %vm401, %v351, 0
        %v424 = vsel %vm401, %v352, 0
        %426 = vmatprep.subr.mxu0 %v330
        %427 = vmatpush1.msra.mxu0 %v329
        %428 = vmatprep.subr.mxu0 %v338
        %429 = vmatpush1.msra.mxu0 %v337
        %430 = vmatprep.subr.mxu0 0.0
        %431 = vmatpush1.msra.mxu0 0.0
        %432 = vmatprep.subr.mxu0 0.0
        %433 = vmatpush1.msra.mxu0 0.0
        %434 = vmatprep.subr.mxu0 0.0
        %435 = vmatpush1.msra.mxu0 0.0
        %436 = vmatprep.subr.mxu0 0.0
        %437 = vmatpush1.msra.mxu0 0.0
        %438 = vmatprep.subr.mxu0 0.0
        %439 = vmatpush1.msra.mxu0 0.0
        %440 = vmatprep.subr.mxu0 0.0
        %441 = vmatpush1.msra.mxu0 0.0
        %442 = vmatprep.subr.mxu0 0.0
        %443 = vmatpush1.msra.mxu0 0.0
        %444 = vmatprep.subr.mxu0 0.0
        %445 = vmatpush1.msra.mxu0 0.0
        %446 = vmatprep.subr.mxu0 0.0
        %447 = vmatpush1.msra.mxu0 0.0
        %448 = vmatprep.subr.mxu0 0.0
        %449 = vmatpush1.msra.mxu0 0.0
        %450 = vmatprep.subr.mxu0 0.0
        %451 = vmatpush1.msra.mxu0 0.0
        %452 = vmatprep.subr.mxu0 0.0
        %453 = vmatpush1.msra.mxu0 0.0
        %454 = vmatprep.subr.mxu0 0.0
        %455 = vmatpush1.msra.mxu0 0.0
        %456 = vmatprep.subr.mxu0 0.0
        %457 = vmatpush1.msra.mxu0 0.0
        %458 = vmatprep.subr.mxu0 0.0
        %459 = vmatpush1.msra.mxu0 0.0
        %460 = vmatprep.subr.mxu0 0.0
        %461 = vmatpush1.msra.mxu0 0.0
        %462 = vmatprep.subr.mxu0 0.0
        %463 = vmatpush1.msra.mxu0 0.0
        %464 = vmatprep.subr.mxu0 0.0
        %465 = vmatpush1.msra.mxu0 0.0
        %466 = vmatprep.subr.mxu0 0.0
        %467 = vmatpush1.msra.mxu0 0.0
        %468 = vmatprep.subr.mxu0 0.0
        %469 = vmatpush1.msra.mxu0 0.0
        %470 = vmatprep.subr.mxu0 0.0
        %471 = vmatpush1.msra.mxu0 0.0
        %472 = vmatprep.subr.mxu0 0.0
        %473 = vmatpush1.msra.mxu0 0.0
        %474 = vmatprep.subr.mxu0 0.0
        %475 = vmatpush1.msra.mxu0 0.0
        %476 = vmatprep.subr.mxu0 0.0
        %477 = vmatpush1.msra.mxu0 0.0
        %478 = vmatprep.subr.mxu0 0.0
        %479 = vmatpush1.msra.mxu0 0.0
        %480 = vmatprep.subr.mxu0 0.0
        %481 = vmatpush1.msra.mxu0 0.0
        %482 = vmatprep.subr.mxu0 0.0
        %483 = vmatpush1.msra.mxu0 0.0
        %484 = vmatprep.subr.mxu0 0.0
        %485 = vmatpush1.msra.mxu0 0.0
        %486 = vmatprep.subr.mxu0 0.0
        %487 = vmatpush1.msra.mxu0 0.0
        %488 = vmatprep.subr.mxu0 0.0
        %489 = vmatpush1.msra.mxu0 0.0
        %490 = vmatprep.mubr.f32.mxu0 0.0
        %491 = vmatmul.mubr.f32.gmra.mrb[0].mxu0 %v403
        %v492 = vpop.f32.mrb[0].mxu0
        %v493 = vadd.f32 %v364, %v492
        %v494 = vpop.f32.mrb[0].mxu0
        %v495 = vadd.f32 %v364, %v494
        %496 = vmatprep.mubr.f32.mxu0 0.0
        %497 = vmatmul.mubr.f32.gmra.mrb[0].mxu0 %v406
        %v498 = vpop.f32.mrb[0].mxu0
        %v499 = vadd.f32 %v369, %v498
        %v500 = vpop.f32.mrb[0].mxu0
        %v501 = vadd.f32 %v369, %v500
        %502 = vmatprep.mubr.f32.mxu0 0.0
        %503 = vmatmul.mubr.f32.gmra.mrb[0].mxu0 %v409
        %v504 = vpop.f32.mrb[0].mxu0
        %v505 = vadd.f32 %v374, %v504
        %v506 = vpop.f32.mrb[0].mxu0
        %v507 = vadd.f32 %v374, %v506
        %508 = vmatprep.mubr.f32.mxu0 0.0
        %509 = vmatmul.mubr.f32.gmra.mrb[0].mxu0 %v412
        %v510 = vpop.f32.mrb[0].mxu0
        %v511 = vadd.f32 %v379, %v510
        %v512 = vpop.f32.mrb[0].mxu0
        %v513 = vadd.f32 %v379, %v512
        %514 = vmatprep.mubr.f32.mxu0 0.0
        %515 = vmatmul.mubr.f32.gmra.mrb[0].mxu0 %v415
        %v516 = vpop.f32.mrb[0].mxu0
        %v517 = vadd.f32 %v384, %v516
        %v518 = vpop.f32.mrb[0].mxu0
        %v519 = vadd.f32 %v384, %v518
        %520 = vmatprep.mubr.f32.mxu0 0.0
        %521 = vmatmul.mubr.f32.gmra.mrb[0].mxu0 %v418
        %v522 = vpop.f32.mrb[0].mxu0
        %v523 = vadd.f32 %v389, %v522
        %v524 = vpop.f32.mrb[0].mxu0
        %v525 = vadd.f32 %v389, %v524
        %526 = vmatprep.mubr.f32.mxu0 0.0
        %527 = vmatmul.mubr.f32.gmra.mrb[0].mxu0 %v421
        %v528 = vpop.f32.mrb[0].mxu0
        %v529 = vadd.f32 %v394, %v528
        %v530 = vpop.f32.mrb[0].mxu0
        %v531 = vadd.f32 %v394, %v530
        %532 = vmatprep.mubr.f32.mxu0 0.0
        %533 = vmatmul.mubr.f32.gmra.mrb[0].mxu0 %v424
        %v534 = vpop.f32.mrb[0].mxu0
        %v535 = vadd.f32 %v399, %v534
        %v536 = vpop.f32.mrb[0].mxu0
        %v537 = vadd.f32 %v399, %v536
        %538 = vdwg.mxu0
        %539 = vmatprep.subr.mxu0 %v332
        %540 = vmatpush1.msra.mxu0 %v331
        %541 = vmatprep.subr.mxu0 %v340
        %542 = vmatpush1.msra.mxu0 %v339
        %543 = vmatprep.subr.mxu0 0.0
        %544 = vmatpush1.msra.mxu0 0.0
        %545 = vmatprep.subr.mxu0 0.0
        %546 = vmatpush1.msra.mxu0 0.0
        %547 = vmatprep.subr.mxu0 0.0
        %548 = vmatpush1.msra.mxu0 0.0
        %549 = vmatprep.subr.mxu0 0.0
        %550 = vmatpush1.msra.mxu0 0.0
        %551 = vmatprep.subr.mxu0 0.0
        %552 = vmatpush1.msra.mxu0 0.0
        %553 = vmatprep.subr.mxu0 0.0
        %554 = vmatpush1.msra.mxu0 0.0
        %555 = vmatprep.subr.mxu0 0.0
        %556 = vmatpush1.msra.mxu0 0.0
        %557 = vmatprep.subr.mxu0 0.0
        %558 = vmatpush1.msra.mxu0 0.0
        %559 = vmatprep.subr.mxu0 0.0
        %560 = vmatpush1.msra.mxu0 0.0
        %561 = vmatprep.subr.mxu0 0.0
        %562 = vmatpush1.msra.mxu0 0.0
        %563 = vmatprep.subr.mxu0 0.0
        %564 = vmatpush1.msra.mxu0 0.0
        %565 = vmatprep.subr.mxu0 0.0
        %566 = vmatpush1.msra.mxu0 0.0
        %567 = vmatprep.subr.mxu0 0.0
        %568 = vmatpush1.msra.mxu0 0.0
        %569 = vmatprep.subr.mxu0 0.0
        %570 = vmatpush1.msra.mxu0 0.0
        %571 = vmatprep.subr.mxu0 0.0
        %572 = vmatpush1.msra.mxu0 0.0
        %573 = vmatprep.subr.mxu0 0.0
        %574 = vmatpush1.msra.mxu0 0.0
        %575 = vmatprep.subr.mxu0 0.0
        %576 = vmatpush1.msra.mxu0 0.0
        %577 = vmatprep.subr.mxu0 0.0
        %578 = vmatpush1.msra.mxu0 0.0
        %579 = vmatprep.subr.mxu0 0.0
        %580 = vmatpush1.msra.mxu0 0.0
        %581 = vmatprep.subr.mxu0 0.0
        %582 = vmatpush1.msra.mxu0 0.0
        %583 = vmatprep.subr.mxu0 0.0
        %584 = vmatpush1.msra.mxu0 0.0
        %585 = vmatprep.subr.mxu0 0.0
        %586 = vmatpush1.msra.mxu0 0.0
        %587 = vmatprep.subr.mxu0 0.0
        %588 = vmatpush1.msra.mxu0 0.0
        %589 = vmatprep.subr.mxu0 0.0
        %590 = vmatpush1.msra.mxu0 0.0
        %591 = vmatprep.subr.mxu0 0.0
        %592 = vmatpush1.msra.mxu0 0.0
        %593 = vmatprep.subr.mxu0 0.0
        %594 = vmatpush1.msra.mxu0 0.0
        %595 = vmatprep.subr.mxu0 0.0
        %596 = vmatpush1.msra.mxu0 0.0
        %597 = vmatprep.subr.mxu0 0.0
        %598 = vmatpush1.msra.mxu0 0.0
        %599 = vmatprep.subr.mxu0 0.0
        %600 = vmatpush1.msra.mxu0 0.0
        %601 = vmatprep.subr.mxu0 0.0
        %602 = vmatpush1.msra.mxu0 0.0
        %603 = vmatprep.mubr.f32.mxu0 0.0
        %604 = vmatmul.mubr.f32.gmra.mrb[0].mxu0 %v403
        %v605 = vpop.f32.mrb[0].mxu0
        %v606 = vadd.f32 %v364, %v605
        %v607 = vpop.f32.mrb[0].mxu0
        %v608 = vadd.f32 %v364, %v607
        %609 = vmatprep.mubr.f32.mxu0 0.0
        %610 = vmatmul.mubr.f32.gmra.mrb[0].mxu0 %v406
        %v611 = vpop.f32.mrb[0].mxu0
        %v612 = vadd.f32 %v369, %v611
        %v613 = vpop.f32.mrb[0].mxu0
        %v614 = vadd.f32 %v369, %v613
        %615 = vmatprep.mubr.f32.mxu0 0.0
        %616 = vmatmul.mubr.f32.gmra.mrb[0].mxu0 %v409
        %v617 = vpop.f32.mrb[0].mxu0
        %v618 = vadd.f32 %v374, %v617
        %v619 = vpop.f32.mrb[0].mxu0
        %v620 = vadd.f32 %v374, %v619
        %621 = vmatprep.mubr.f32.mxu0 0.0
        %622 = vmatmul.mubr.f32.gmra.mrb[0].mxu0 %v412
        %v623 = vpop.f32.mrb[0].mxu0
        %v624 = vadd.f32 %v379, %v623
        %v625 = vpop.f32.mrb[0].mxu0
        %v626 = vadd.f32 %v379, %v625
        %627 = vmatprep.mubr.f32.mxu0 0.0
        %628 = vmatmul.mubr.f32.gmra.mrb[0].mxu0 %v415
        %v629 = vpop.f32.mrb[0].mxu0
        %v630 = vadd.f32 %v384, %v629
        %v631 = vpop.f32.mrb[0].mxu0
        %v632 = vadd.f32 %v384, %v631
        %633 = vmatprep.mubr.f32.mxu0 0.0
        %634 = vmatmul.mubr.f32.gmra.mrb[0].mxu0 %v418
        %v635 = vpop.f32.mrb[0].mxu0
        %v636 = vadd.f32 %v389, %v635
        %v637 = vpop.f32.mrb[0].mxu0
        %v638 = vadd.f32 %v389, %v637
        %639 = vmatprep.mubr.f32.mxu0 0.0
        %640 = vmatmul.mubr.f32.gmra.mrb[0].mxu0 %v421
        %v641 = vpop.f32.mrb[0].mxu0
        %v642 = vadd.f32 %v394, %v641
        %v643 = vpop.f32.mrb[0].mxu0
        %v644 = vadd.f32 %v394, %v643
        %645 = vmatprep.mubr.f32.mxu0 0.0
        %646 = vmatmul.mubr.f32.gmra.mrb[0].mxu0 %v424
        %v647 = vpop.f32.mrb[0].mxu0
        %v648 = vadd.f32 %v399, %v647
        %v649 = vpop.f32.mrb[0].mxu0
        %v650 = vadd.f32 %v399, %v649
        %651 = vdwg.mxu0
        %652 = vmatprep.subr.mxu0 %v334
        %653 = vmatpush1.msra.mxu0 %v333
        %654 = vmatprep.subr.mxu0 %v342
        %655 = vmatpush1.msra.mxu0 %v341
        %656 = vmatprep.subr.mxu0 0.0
        %657 = vmatpush1.msra.mxu0 0.0
        %658 = vmatprep.subr.mxu0 0.0
        %659 = vmatpush1.msra.mxu0 0.0
        %660 = vmatprep.subr.mxu0 0.0
        %661 = vmatpush1.msra.mxu0 0.0
        %662 = vmatprep.subr.mxu0 0.0
        %663 = vmatpush1.msra.mxu0 0.0
        %664 = vmatprep.subr.mxu0 0.0
        %665 = vmatpush1.msra.mxu0 0.0
        %666 = vmatprep.subr.mxu0 0.0
        %667 = vmatpush1.msra.mxu0 0.0
        %668 = vmatprep.subr.mxu0 0.0
        %669 = vmatpush1.msra.mxu0 0.0
        %670 = vmatprep.subr.mxu0 0.0
        %671 = vmatpush1.msra.mxu0 0.0
        %672 = vmatprep.subr.mxu0 0.0
        %673 = vmatpush1.msra.mxu0 0.0
        %674 = vmatprep.subr.mxu0 0.0
        %675 = vmatpush1.msra.mxu0 0.0
        %676 = vmatprep.subr.mxu0 0.0
        %677 = vmatpush1.msra.mxu0 0.0
        %678 = vmatprep.subr.mxu0 0.0
        %679 = vmatpush1.msra.mxu0 0.0
        %680 = vmatprep.subr.mxu0 0.0
        %681 = vmatpush1.msra.mxu0 0.0
        %682 = vmatprep.subr.mxu0 0.0
        %683 = vmatpush1.msra.mxu0 0.0
        %684 = vmatprep.subr.mxu0 0.0
        %685 = vmatpush1.msra.mxu0 0.0
        %686 = vmatprep.subr.mxu0 0.0
        %687 = vmatpush1.msra.mxu0 0.0
        %688 = vmatprep.subr.mxu0 0.0
        %689 = vmatpush1.msra.mxu0 0.0
        %690 = vmatprep.subr.mxu0 0.0
        %691 = vmatpush1.msra.mxu0 0.0
        %692 = vmatprep.subr.mxu0 0.0
        %693 = vmatpush1.msra.mxu0 0.0
        %694 = vmatprep.subr.mxu0 0.0
        %695 = vmatpush1.msra.mxu0 0.0
        %696 = vmatprep.subr.mxu0 0.0
        %697 = vmatpush1.msra.mxu0 0.0
        %698 = vmatprep.subr.mxu0 0.0
        %699 = vmatpush1.msra.mxu0 0.0
        %700 = vmatprep.subr.mxu0 0.0
        %701 = vmatpush1.msra.mxu0 0.0
        %702 = vmatprep.subr.mxu0 0.0
        %703 = vmatpush1.msra.mxu0 0.0
        %704 = vmatprep.subr.mxu0 0.0
        %705 = vmatpush1.msra.mxu0 0.0
        %706 = vmatprep.subr.mxu0 0.0
        %707 = vmatpush1.msra.mxu0 0.0
        %708 = vmatprep.subr.mxu0 0.0
        %709 = vmatpush1.msra.mxu0 0.0
        %710 = vmatprep.subr.mxu0 0.0
        %711 = vmatpush1.msra.mxu0 0.0
        %712 = vmatprep.subr.mxu0 0.0
        %713 = vmatpush1.msra.mxu0 0.0
        %714 = vmatprep.subr.mxu0 0.0
        %715 = vmatpush1.msra.mxu0 0.0
        %716 = vmatprep.mubr.f32.mxu0 0.0
        %717 = vmatmul.mubr.f32.gmra.mrb[0].mxu0 %v403
        %v718 = vpop.f32.mrb[0].mxu0
        %v719 = vadd.f32 %v364, %v718
        %v720 = vpop.f32.mrb[0].mxu0
        %v721 = vadd.f32 %v364, %v720
        %722 = vmatprep.mubr.f32.mxu0 0.0
        %723 = vmatmul.mubr.f32.gmra.mrb[0].mxu0 %v406
        %v724 = vpop.f32.mrb[0].mxu0
        %v725 = vadd.f32 %v369, %v724
        %v726 = vpop.f32.mrb[0].mxu0
        %v727 = vadd.f32 %v369, %v726
        %728 = vmatprep.mubr.f32.mxu0 0.0
        %729 = vmatmul.mubr.f32.gmra.mrb[0].mxu0 %v409
        %v730 = vpop.f32.mrb[0].mxu0
        %v731 = vadd.f32 %v374, %v730
        %v732 = vpop.f32.mrb[0].mxu0
        %v733 = vadd.f32 %v374, %v732
        %734 = vmatprep.mubr.f32.mxu0 0.0
        %735 = vmatmul.mubr.f32.gmra.mrb[0].mxu0 %v412
        %v736 = vpop.f32.mrb[0].mxu0
        %v737 = vadd.f32 %v379, %v736
        %v738 = vpop.f32.mrb[0].mxu0
        %v739 = vadd.f32 %v379, %v738
        %740 = vmatprep.mubr.f32.mxu0 0.0
        %741 = vmatmul.mubr.f32.gmra.mrb[0].mxu0 %v415
        %v742 = vpop.f32.mrb[0].mxu0
        %v743 = vadd.f32 %v384, %v742
        %v744 = vpop.f32.mrb[0].mxu0
        %v745 = vadd.f32 %v384, %v744
        %746 = vmatprep.mubr.f32.mxu0 0.0
        %747 = vmatmul.mubr.f32.gmra.mrb[0].mxu0 %v418
        %v748 = vpop.f32.mrb[0].mxu0
        %v749 = vadd.f32 %v389, %v748
        %v750 = vpop.f32.mrb[0].mxu0
        %v751 = vadd.f32 %v389, %v750
        %752 = vmatprep.mubr.f32.mxu0 0.0
        %753 = vmatmul.mubr.f32.gmra.mrb[0].mxu0 %v421
        %v754 = vpop.f32.mrb[0].mxu0
        %v755 = vadd.f32 %v394, %v754
        %v756 = vpop.f32.mrb[0].mxu0
        %v757 = vadd.f32 %v394, %v756
        %758 = vmatprep.mubr.f32.mxu0 0.0
        %759 = vmatmul.mubr.f32.gmra.mrb[0].mxu0 %v424
        %v760 = vpop.f32.mrb[0].mxu0
        %v761 = vadd.f32 %v399, %v760
        %v762 = vpop.f32.mrb[0].mxu0
        %v763 = vadd.f32 %v399, %v762
        %764 = vdwg.mxu0
        %765 = vmatprep.subr.mxu0 %v336
        %766 = vmatpush1.msra.mxu0 %v335
        %767 = vmatprep.subr.mxu0 %v344
        %768 = vmatpush1.msra.mxu0 %v343
        %769 = vmatprep.subr.mxu0 0.0
        %770 = vmatpush1.msra.mxu0 0.0
        %771 = vmatprep.subr.mxu0 0.0
        %772 = vmatpush1.msra.mxu0 0.0
        %773 = vmatprep.subr.mxu0 0.0
        %774 = vmatpush1.msra.mxu0 0.0
        %775 = vmatprep.subr.mxu0 0.0
        %776 = vmatpush1.msra.mxu0 0.0
        %777 = vmatprep.subr.mxu0 0.0
        %778 = vmatpush1.msra.mxu0 0.0
        %779 = vmatprep.subr.mxu0 0.0
        %780 = vmatpush1.msra.mxu0 0.0
        %781 = vmatprep.subr.mxu0 0.0
        %782 = vmatpush1.msra.mxu0 0.0
        %783 = vmatprep.subr.mxu0 0.0
        %784 = vmatpush1.msra.mxu0 0.0
        %785 = vmatprep.subr.mxu0 0.0
        %786 = vmatpush1.msra.mxu0 0.0
        %787 = vmatprep.subr.mxu0 0.0
        %788 = vmatpush1.msra.mxu0 0.0
        %789 = vmatprep.subr.mxu0 0.0
        %790 = vmatpush1.msra.mxu0 0.0
        %791 = vmatprep.subr.mxu0 0.0
        %792 = vmatpush1.msra.mxu0 0.0
        %793 = vmatprep.subr.mxu0 0.0
        %794 = vmatpush1.msra.mxu0 0.0
        %795 = vmatprep.subr.mxu0 0.0
        %796 = vmatpush1.msra.mxu0 0.0
        %797 = vmatprep.subr.mxu0 0.0
        %798 = vmatpush1.msra.mxu0 0.0
        %799 = vmatprep.subr.mxu0 0.0
        %800 = vmatpush1.msra.mxu0 0.0
        %801 = vmatprep.subr.mxu0 0.0
        %802 = vmatpush1.msra.mxu0 0.0
        %803 = vmatprep.subr.mxu0 0.0
        %804 = vmatpush1.msra.mxu0 0.0
        %805 = vmatprep.subr.mxu0 0.0
        %806 = vmatpush1.msra.mxu0 0.0
        %807 = vmatprep.subr.mxu0 0.0
        %808 = vmatpush1.msra.mxu0 0.0
        %809 = vmatprep.subr.mxu0 0.0
        %810 = vmatpush1.msra.mxu0 0.0
        %811 = vmatprep.subr.mxu0 0.0
        %812 = vmatpush1.msra.mxu0 0.0
        %813 = vmatprep.subr.mxu0 0.0
        %814 = vmatpush1.msra.mxu0 0.0
        %815 = vmatprep.subr.mxu0 0.0
        %816 = vmatpush1.msra.mxu0 0.0
        %817 = vmatprep.subr.mxu0 0.0
        %818 = vmatpush1.msra.mxu0 0.0
        %819 = vmatprep.subr.mxu0 0.0
        %820 = vmatpush1.msra.mxu0 0.0
        %821 = vmatprep.subr.mxu0 0.0
        %822 = vmatpush1.msra.mxu0 0.0
        %823 = vmatprep.subr.mxu0 0.0
        %824 = vmatpush1.msra.mxu0 0.0
        %825 = vmatprep.subr.mxu0 0.0
        %826 = vmatpush1.msra.mxu0 0.0
        %827 = vmatprep.subr.mxu0 0.0
        %828 = vmatpush1.msra.mxu0 0.0
        %829 = vmatprep.mubr.f32.mxu0 0.0
        %830 = vmatmul.mubr.f32.gmra.mrb[0].mxu0 %v403
        %v831 = vpop.f32.mrb[0].mxu0
        %v832 = vadd.f32 %v364, %v831
        %v833 = vpop.f32.mrb[0].mxu0
        %v834 = vadd.f32 %v364, %v833
        %835 = vmatprep.mubr.f32.mxu0 0.0
        %836 = vmatmul.mubr.f32.gmra.mrb[0].mxu0 %v406
        %v837 = vpop.f32.mrb[0].mxu0
        %v838 = vadd.f32 %v369, %v837
        %v839 = vpop.f32.mrb[0].mxu0
        %v840 = vadd.f32 %v369, %v839
        %841 = vmatprep.mubr.f32.mxu0 0.0
        %842 = vmatmul.mubr.f32.gmra.mrb[0].mxu0 %v409
        %v843 = vpop.f32.mrb[0].mxu0
        %v844 = vadd.f32 %v374, %v843
        %v845 = vpop.f32.mrb[0].mxu0
        %v846 = vadd.f32 %v374, %v845
        %847 = vmatprep.mubr.f32.mxu0 0.0
        %848 = vmatmul.mubr.f32.gmra.mrb[0].mxu0 %v412
        %v849 = vpop.f32.mrb[0].mxu0
        %v850 = vadd.f32 %v379, %v849
        %v851 = vpop.f32.mrb[0].mxu0
        %v852 = vadd.f32 %v379, %v851
        %853 = vmatprep.mubr.f32.mxu0 0.0
        %854 = vmatmul.mubr.f32.gmra.mrb[0].mxu0 %v415
        %v855 = vpop.f32.mrb[0].mxu0
        %v856 = vadd.f32 %v384, %v855
        %v857 = vpop.f32.mrb[0].mxu0
        %v858 = vadd.f32 %v384, %v857
        %859 = vmatprep.mubr.f32.mxu0 0.0
        %860 = vmatmul.mubr.f32.gmra.mrb[0].mxu0 %v418
        %v861 = vpop.f32.mrb[0].mxu0
        %v862 = vadd.f32 %v389, %v861
        %v863 = vpop.f32.mrb[0].mxu0
        %v864 = vadd.f32 %v389, %v863
        %865 = vmatprep.mubr.f32.mxu0 0.0
        %866 = vmatmul.mubr.f32.gmra.mrb[0].mxu0 %v421
        %v867 = vpop.f32.mrb[0].mxu0
        %v868 = vadd.f32 %v394, %v867
        %v869 = vpop.f32.mrb[0].mxu0
        %v870 = vadd.f32 %v394, %v869
        %871 = vmatprep.mubr.f32.mxu0 0.0
        %872 = vmatmul.mubr.f32.gmra.mrb[0].mxu0 %v424
        %v873 = vpop.f32.mrb[0].mxu0
        %v874 = vadd.f32 %v399, %v873
        %v875 = vpop.f32.mrb[0].mxu0
        %v876 = vadd.f32 %v399, %v875
        %877 = vdwg.mxu0
        %v878 = vtanh.pop %v493
        %v879 = vtanh.pop %v495
        %v880 = vtanh.pop %v606
        %v881 = vtanh.pop %v608
        %v882 = vtanh.pop %v719
        %v883 = vtanh.pop %v721
        %v884 = vtanh.pop %v832
        %v885 = vtanh.pop %v834
        %v886 = vtanh.pop %v499
        %v887 = vtanh.pop %v501
        %v888 = vtanh.pop %v612
        %v889 = vtanh.pop %v614
        %v890 = vtanh.pop %v725
        %v891 = vtanh.pop %v727
        %v892 = vtanh.pop %v838
        %v893 = vtanh.pop %v840
        %v894 = vtanh.pop %v505
        %v895 = vtanh.pop %v507
        %v896 = vtanh.pop %v618
        %v897 = vtanh.pop %v620
        %v898 = vtanh.pop %v731
        %v899 = vtanh.pop %v733
        %v900 = vtanh.pop %v844
        %v901 = vtanh.pop %v846
        %v902 = vtanh.pop %v511
        %v903 = vtanh.pop %v513
        %v904 = vtanh.pop %v624
        %v905 = vtanh.pop %v626
        %v906 = vtanh.pop %v737
        %v907 = vtanh.pop %v739
        %v908 = vtanh.pop %v850
        %v909 = vtanh.pop %v852
        %v910 = vtanh.pop %v517
        %v911 = vtanh.pop %v519
        %v912 = vtanh.pop %v630
        %v913 = vtanh.pop %v632
        %v914 = vtanh.pop %v743
        %v915 = vtanh.pop %v745
        %v916 = vtanh.pop %v856
        %v917 = vtanh.pop %v858
        %v918 = vtanh.pop %v523
        %v919 = vtanh.pop %v525
        %v920 = vtanh.pop %v636
        %v921 = vtanh.pop %v638
        %v922 = vtanh.pop %v749
        %v923 = vtanh.pop %v751
        %v924 = vtanh.pop %v862
        %v925 = vtanh.pop %v864
        %v926 = vtanh.pop %v529
        %v927 = vtanh.pop %v531
        %v928 = vtanh.pop %v642
        %v929 = vtanh.pop %v644
        %v930 = vtanh.pop %v755
        %v931 = vtanh.pop %v757
        %v932 = vtanh.pop %v868
        %v933 = vtanh.pop %v870
        %v934 = vtanh.pop %v535
        %v935 = vtanh.pop %v537
        %v936 = vtanh.pop %v648
        %v937 = vtanh.pop %v650
        %v938 = vtanh.pop %v761
        %v939 = vtanh.pop %v763
        %v940 = vtanh.pop %v874
        %v941 = vtanh.pop %v876
        %v942 = vld [vmem:[%s3] sm:$0xff]
        %v943 = vld [vmem:[%s3 + $0x8] sm:$0xff]
        %v944 = vld [vmem:[%s3 + $0x10] sm:$0xff]
        %v945 = vld [vmem:[%s3 + $0x18] sm:$0xff]
        %v946 = vld [vmem:[%s3 + $0x20] sm:$0xff]
        %v947 = vld [vmem:[%s3 + $0x28] sm:$0xff]
        %v948 = vld [vmem:[%s3 + $0x30] sm:$0xff]
        %v949 = vld [vmem:[%s3 + $0x38] sm:$0xff]
        %v950 = vld [vmem:[%s4] sm:$0xff]
        %v951 = vld [vmem:[%s4 + $0x8] sm:$0xff]
        %v952 = vld [vmem:[%s4 + $0x10] sm:$0xff]
        %v953 = vld [vmem:[%s4 + $0x18] sm:$0xff]
        %v954 = vld [vmem:[%s4 + $0x20] sm:$0xff]
        %v955 = vld [vmem:[%s4 + $0x28] sm:$0xff]
        %v956 = vld [vmem:[%s4 + $0x30] sm:$0xff]
        %v957 = vld [vmem:[%s4 + $0x38] sm:$0xff]
        %959 = vset.pattern.permute.xlu0 0
        %960 = vperm.xlu0 %959, %v950
        %v961 = vpop.permute.xlu0 %960
        %964 = vset.pattern.permute.xlu0 0
        %965 = vperm.xlu0 %964, %v951
        %v966 = vpop.permute.xlu0 %965
        %969 = vset.pattern.permute.xlu0 0
        %970 = vperm.xlu0 %969, %v952
        %v971 = vpop.permute.xlu0 %970
        %974 = vset.pattern.permute.xlu0 0
        %975 = vperm.xlu0 %974, %v953
        %v976 = vpop.permute.xlu0 %975
        %979 = vset.pattern.permute.xlu0 0
        %980 = vperm.xlu0 %979, %v954
        %v981 = vpop.permute.xlu0 %980
        %984 = vset.pattern.permute.xlu0 0
        %985 = vperm.xlu0 %984, %v955
        %v986 = vpop.permute.xlu0 %985
        %989 = vset.pattern.permute.xlu0 0
        %990 = vperm.xlu0 %989, %v956
        %v991 = vpop.permute.xlu0 %990
        %994 = vset.pattern.permute.xlu0 0
        %995 = vperm.xlu0 %994, %v957
        %v996 = vpop.permute.xlu0 %995
        %vm998 = vcmask 523264
        %v1000 = vsel %vm998, %v942, 0
        %v1003 = vsel %vm998, %v943, 0
        %v1006 = vsel %vm998, %v944, 0
        %v1009 = vsel %vm998, %v945, 0
        %v1012 = vsel %vm998, %v946, 0
        %v1015 = vsel %vm998, %v947, 0
        %v1018 = vsel %vm998, %v948, 0
        %v1021 = vsel %vm998, %v949, 0
        %1023 = vmatprep.subr.mxu0 %v879
        %1024 = vmatpush1.msra.mxu0 %v878
        %1025 = vmatprep.subr.mxu0 %v887
        %1026 = vmatpush1.msra.mxu0 %v886
        %1027 = vmatprep.subr.mxu0 %v895
        %1028 = vmatpush1.msra.mxu0 %v894
        %1029 = vmatprep.subr.mxu0 %v903
        %1030 = vmatpush1.msra.mxu0 %v902
        %1031 = vmatprep.subr.mxu0 %v911
        %1032 = vmatpush1.msra.mxu0 %v910
        %1033 = vmatprep.subr.mxu0 %v919
        %1034 = vmatpush1.msra.mxu0 %v918
        %1035 = vmatprep.subr.mxu0 %v927
        %1036 = vmatpush1.msra.mxu0 %v926
        %1037 = vmatprep.subr.mxu0 %v935
        %1038 = vmatpush1.msra.mxu0 %v934
        %1039 = vmatprep.subr.mxu0 0.0
        %1040 = vmatpush1.msra.mxu0 0.0
        %1041 = vmatprep.subr.mxu0 0.0
        %1042 = vmatpush1.msra.mxu0 0.0
        %1043 = vmatprep.subr.mxu0 0.0
        %1044 = vmatpush1.msra.mxu0 0.0
        %1045 = vmatprep.subr.mxu0 0.0
        %1046 = vmatpush1.msra.mxu0 0.0
        %1047 = vmatprep.subr.mxu0 0.0
        %1048 = vmatpush1.msra.mxu0 0.0
        %1049 = vmatprep.subr.mxu0 0.0
        %1050 = vmatpush1.msra.mxu0 0.0
        %1051 = vmatprep.subr.mxu0 0.0
        %1052 = vmatpush1.msra.mxu0 0.0
        %1053 = vmatprep.subr.mxu0 0.0
        %1054 = vmatpush1.msra.mxu0 0.0
        %1055 = vmatprep.subr.mxu0 0.0
        %1056 = vmatpush1.msra.mxu0 0.0
        %1057 = vmatprep.subr.mxu0 0.0
        %1058 = vmatpush1.msra.mxu0 0.0
        %1059 = vmatprep.subr.mxu0 0.0
        %1060 = vmatpush1.msra.mxu0 0.0
        %1061 = vmatprep.subr.mxu0 0.0
        %1062 = vmatpush1.msra.mxu0 0.0
        %1063 = vmatprep.subr.mxu0 0.0
        %1064 = vmatpush1.msra.mxu0 0.0
        %1065 = vmatprep.subr.mxu0 0.0
        %1066 = vmatpush1.msra.mxu0 0.0
        %1067 = vmatprep.subr.mxu0 0.0
        %1068 = vmatpush1.msra.mxu0 0.0
        %1069 = vmatprep.subr.mxu0 0.0
        %1070 = vmatpush1.msra.mxu0 0.0
        %1071 = vmatprep.subr.mxu0 0.0
        %1072 = vmatpush1.msra.mxu0 0.0
        %1073 = vmatprep.subr.mxu0 0.0
        %1074 = vmatpush1.msra.mxu0 0.0
        %1075 = vmatprep.subr.mxu0 0.0
        %1076 = vmatpush1.msra.mxu0 0.0
        %1077 = vmatprep.subr.mxu0 0.0
        %1078 = vmatpush1.msra.mxu0 0.0
        %1079 = vmatprep.subr.mxu0 0.0
        %1080 = vmatpush1.msra.mxu0 0.0
        %1081 = vmatprep.subr.mxu0 0.0
        %1082 = vmatpush1.msra.mxu0 0.0
        %1083 = vmatprep.subr.mxu0 0.0
        %1084 = vmatpush1.msra.mxu0 0.0
        %1085 = vmatprep.subr.mxu0 0.0
        %1086 = vmatpush1.msra.mxu0 0.0
        %1087 = vmatprep.mubr.f32.mxu0 0.0
        %1088 = vmatmul.mubr.f32.gmra.mrb[0].mxu0 %v1000
        %v1089 = vpop.f32.mrb[0].mxu0
        %v1090 = vadd.f32 %v961, %v1089
        %v1091 = vpop.f32.mrb[0].mxu0
        %v1092 = vadd.f32 %v961, %v1091
        %1093 = vmatprep.mubr.f32.mxu0 0.0
        %1094 = vmatmul.mubr.f32.gmra.mrb[0].mxu0 %v1003
        %v1095 = vpop.f32.mrb[0].mxu0
        %v1096 = vadd.f32 %v966, %v1095
        %v1097 = vpop.f32.mrb[0].mxu0
        %v1098 = vadd.f32 %v966, %v1097
        %1099 = vmatprep.mubr.f32.mxu0 0.0
        %1100 = vmatmul.mubr.f32.gmra.mrb[0].mxu0 %v1006
        %v1101 = vpop.f32.mrb[0].mxu0
        %v1102 = vadd.f32 %v971, %v1101
        %v1103 = vpop.f32.mrb[0].mxu0
        %v1104 = vadd.f32 %v971, %v1103
        %1105 = vmatprep.mubr.f32.mxu0 0.0
        %1106 = vmatmul.mubr.f32.gmra.mrb[0].mxu0 %v1009
        %v1107 = vpop.f32.mrb[0].mxu0
        %v1108 = vadd.f32 %v976, %v1107
        %v1109 = vpop.f32.mrb[0].mxu0
        %v1110 = vadd.f32 %v976, %v1109
        %1111 = vmatprep.mubr.f32.mxu0 0.0
        %1112 = vmatmul.mubr.f32.gmra.mrb[0].mxu0 %v1012
        %v1113 = vpop.f32.mrb[0].mxu0
        %v1114 = vadd.f32 %v981, %v1113
        %v1115 = vpop.f32.mrb[0].mxu0
        %v1116 = vadd.f32 %v981, %v1115
        %1117 = vmatprep.mubr.f32.mxu0 0.0
        %1118 = vmatmul.mubr.f32.gmra.mrb[0].mxu0 %v1015
        %v1119 = vpop.f32.mrb[0].mxu0
        %v1120 = vadd.f32 %v986, %v1119
        %v1121 = vpop.f32.mrb[0].mxu0
        %v1122 = vadd.f32 %v986, %v1121
        %1123 = vmatprep.mubr.f32.mxu0 0.0
        %1124 = vmatmul.mubr.f32.gmra.mrb[0].mxu0 %v1018
        %v1125 = vpop.f32.mrb[0].mxu0
        %v1126 = vadd.f32 %v991, %v1125
        %v1127 = vpop.f32.mrb[0].mxu0
        %v1128 = vadd.f32 %v991, %v1127
        %1129 = vmatprep.mubr.f32.mxu0 0.0
        %1130 = vmatmul.mubr.f32.gmra.mrb[0].mxu0 %v1021
        %v1131 = vpop.f32.mrb[0].mxu0
        %v1132 = vadd.f32 %v996, %v1131
        %v1133 = vpop.f32.mrb[0].mxu0
        %v1134 = vadd.f32 %v996, %v1133
        %1135 = vdwg.mxu0
        %1136 = vmatprep.subr.mxu0 %v881
        %1137 = vmatpush1.msra.mxu0 %v880
        %1138 = vmatprep.subr.mxu0 %v889
        %1139 = vmatpush1.msra.mxu0 %v888
        %1140 = vmatprep.subr.mxu0 %v897
        %1141 = vmatpush1.msra.mxu0 %v896
        %1142 = vmatprep.subr.mxu0 %v905
        %1143 = vmatpush1.msra.mxu0 %v904
        %1144 = vmatprep.subr.mxu0 %v913
        %1145 = vmatpush1.msra.mxu0 %v912
        %1146 = vmatprep.subr.mxu0 %v921
        %1147 = vmatpush1.msra.mxu0 %v920
        %1148 = vmatprep.subr.mxu0 %v929
        %1149 = vmatpush1.msra.mxu0 %v928
        %1150 = vmatprep.subr.mxu0 %v937
        %1151 = vmatpush1.msra.mxu0 %v936
        %1152 = vmatprep.subr.mxu0 0.0
        %1153 = vmatpush1.msra.mxu0 0.0
        %1154 = vmatprep.subr.mxu0 0.0
        %1155 = vmatpush1.msra.mxu0 0.0
        %1156 = vmatprep.subr.mxu0 0.0
        %1157 = vmatpush1.msra.mxu0 0.0
        %1158 = vmatprep.subr.mxu0 0.0
        %1159 = vmatpush1.msra.mxu0 0.0
        %1160 = vmatprep.subr.mxu0 0.0
        %1161 = vmatpush1.msra.mxu0 0.0
        %1162 = vmatprep.subr.mxu0 0.0
        %1163 = vmatpush1.msra.mxu0 0.0
        %1164 = vmatprep.subr.mxu0 0.0
        %1165 = vmatpush1.msra.mxu0 0.0
        %1166 = vmatprep.subr.mxu0 0.0
        %1167 = vmatpush1.msra.mxu0 0.0
        %1168 = vmatprep.subr.mxu0 0.0
        %1169 = vmatpush1.msra.mxu0 0.0
        %1170 = vmatprep.subr.mxu0 0.0
        %1171 = vmatpush1.msra.mxu0 0.0
        %1172 = vmatprep.subr.mxu0 0.0
        %1173 = vmatpush1.msra.mxu0 0.0
        %1174 = vmatprep.subr.mxu0 0.0
        %1175 = vmatpush1.msra.mxu0 0.0
        %1176 = vmatprep.subr.mxu0 0.0
        %1177 = vmatpush1.msra.mxu0 0.0
        %1178 = vmatprep.subr.mxu0 0.0
        %1179 = vmatpush1.msra.mxu0 0.0
        %1180 = vmatprep.subr.mxu0 0.0
        %1181 = vmatpush1.msra.mxu0 0.0
        %1182 = vmatprep.subr.mxu0 0.0
        %1183 = vmatpush1.msra.mxu0 0.0
        %1184 = vmatprep.subr.mxu0 0.0
        %1185 = vmatpush1.msra.mxu0 0.0
        %1186 = vmatprep.subr.mxu0 0.0
        %1187 = vmatpush1.msra.mxu0 0.0
        %1188 = vmatprep.subr.mxu0 0.0
        %1189 = vmatpush1.msra.mxu0 0.0
        %1190 = vmatprep.subr.mxu0 0.0
        %1191 = vmatpush1.msra.mxu0 0.0
        %1192 = vmatprep.subr.mxu0 0.0
        %1193 = vmatpush1.msra.mxu0 0.0
        %1194 = vmatprep.subr.mxu0 0.0
        %1195 = vmatpush1.msra.mxu0 0.0
        %1196 = vmatprep.subr.mxu0 0.0
        %1197 = vmatpush1.msra.mxu0 0.0
        %1198 = vmatprep.subr.mxu0 0.0
        %1199 = vmatpush1.msra.mxu0 0.0
        %1200 = vmatprep.mubr.f32.mxu0 0.0
        %1201 = vmatmul.mubr.f32.gmra.mrb[0].mxu0 %v1000
        %v1202 = vpop.f32.mrb[0].mxu0
        %v1203 = vadd.f32 %v961, %v1202
        %v1204 = vpop.f32.mrb[0].mxu0
        %v1205 = vadd.f32 %v961, %v1204
        %1206 = vmatprep.mubr.f32.mxu0 0.0
        %1207 = vmatmul.mubr.f32.gmra.mrb[0].mxu0 %v1003
        %v1208 = vpop.f32.mrb[0].mxu0
        %v1209 = vadd.f32 %v966, %v1208
        %v1210 = vpop.f32.mrb[0].mxu0
        %v1211 = vadd.f32 %v966, %v1210
        %1212 = vmatprep.mubr.f32.mxu0 0.0
        %1213 = vmatmul.mubr.f32.gmra.mrb[0].mxu0 %v1006
        %v1214 = vpop.f32.mrb[0].mxu0
        %v1215 = vadd.f32 %v971, %v1214
        %v1216 = vpop.f32.mrb[0].mxu0
        %v1217 = vadd.f32 %v971, %v1216
        %1218 = vmatprep.mubr.f32.mxu0 0.0
        %1219 = vmatmul.mubr.f32.gmra.mrb[0].mxu0 %v1009
        %v1220 = vpop.f32.mrb[0].mxu0
        %v1221 = vadd.f32 %v976, %v1220
        %v1222 = vpop.f32.mrb[0].mxu0
        %v1223 = vadd.f32 %v976, %v1222
        %1224 = vmatprep.mubr.f32.mxu0 0.0
        %1225 = vmatmul.mubr.f32.gmra.mrb[0].mxu0 %v1012
        %v1226 = vpop.f32.mrb[0].mxu0
        %v1227 = vadd.f32 %v981, %v1226
        %v1228 = vpop.f32.mrb[0].mxu0
        %v1229 = vadd.f32 %v981, %v1228
        %1230 = vmatprep.mubr.f32.mxu0 0.0
        %1231 = vmatmul.mubr.f32.gmra.mrb[0].mxu0 %v1015
        %v1232 = vpop.f32.mrb[0].mxu0
        %v1233 = vadd.f32 %v986, %v1232
        %v1234 = vpop.f32.mrb[0].mxu0
        %v1235 = vadd.f32 %v986, %v1234
        %1236 = vmatprep.mubr.f32.mxu0 0.0
        %1237 = vmatmul.mubr.f32.gmra.mrb[0].mxu0 %v1018
        %v1238 = vpop.f32.mrb[0].mxu0
        %v1239 = vadd.f32 %v991, %v1238
        %v1240 = vpop.f32.mrb[0].mxu0
        %v1241 = vadd.f32 %v991, %v1240
        %1242 = vmatprep.mubr.f32.mxu0 0.0
        %1243 = vmatmul.mubr.f32.gmra.mrb[0].mxu0 %v1021
        %v1244 = vpop.f32.mrb[0].mxu0
        %v1245 = vadd.f32 %v996, %v1244
        %v1246 = vpop.f32.mrb[0].mxu0
        %v1247 = vadd.f32 %v996, %v1246
        %1248 = vdwg.mxu0
        %1249 = vmatprep.subr.mxu0 %v883
        %1250 = vmatpush1.msra.mxu0 %v882
        %1251 = vmatprep.subr.mxu0 %v891
        %1252 = vmatpush1.msra.mxu0 %v890
        %1253 = vmatprep.subr.mxu0 %v899
        %1254 = vmatpush1.msra.mxu0 %v898
        %1255 = vmatprep.subr.mxu0 %v907
        %1256 = vmatpush1.msra.mxu0 %v906
        %1257 = vmatprep.subr.mxu0 %v915
        %1258 = vmatpush1.msra.mxu0 %v914
        %1259 = vmatprep.subr.mxu0 %v923
        %1260 = vmatpush1.msra.mxu0 %v922
        %1261 = vmatprep.subr.mxu0 %v931
        %1262 = vmatpush1.msra.mxu0 %v930
        %1263 = vmatprep.subr.mxu0 %v939
        %1264 = vmatpush1.msra.mxu0 %v938
        %1265 = vmatprep.subr.mxu0 0.0
        %1266 = vmatpush1.msra.mxu0 0.0
        %1267 = vmatprep.subr.mxu0 0.0
        %1268 = vmatpush1.msra.mxu0 0.0
        %1269 = vmatprep.subr.mxu0 0.0
        %1270 = vmatpush1.msra.mxu0 0.0
        %1271 = vmatprep.subr.mxu0 0.0
        %1272 = vmatpush1.msra.mxu0 0.0
        %1273 = vmatprep.subr.mxu0 0.0
        %1274 = vmatpush1.msra.mxu0 0.0
        %1275 = vmatprep.subr.mxu0 0.0
        %1276 = vmatpush1.msra.mxu0 0.0
        %1277 = vmatprep.subr.mxu0 0.0
        %1278 = vmatpush1.msra.mxu0 0.0
        %1279 = vmatprep.subr.mxu0 0.0
        %1280 = vmatpush1.msra.mxu0 0.0
        %1281 = vmatprep.subr.mxu0 0.0
        %1282 = vmatpush1.msra.mxu0 0.0
        %1283 = vmatprep.subr.mxu0 0.0
        %1284 = vmatpush1.msra.mxu0 0.0
        %1285 = vmatprep.subr.mxu0 0.0
        %1286 = vmatpush1.msra.mxu0 0.0
        %1287 = vmatprep.subr.mxu0 0.0
        %1288 = vmatpush1.msra.mxu0 0.0
        %1289 = vmatprep.subr.mxu0 0.0
        %1290 = vmatpush1.msra.mxu0 0.0
        %1291 = vmatprep.subr.mxu0 0.0
        %1292 = vmatpush1.msra.mxu0 0.0
        %1293 = vmatprep.subr.mxu0 0.0
        %1294 = vmatpush1.msra.mxu0 0.0
        %1295 = vmatprep.subr.mxu0 0.0
        %1296 = vmatpush1.msra.mxu0 0.0
        %1297 = vmatprep.subr.mxu0 0.0
        %1298 = vmatpush1.msra.mxu0 0.0
        %1299 = vmatprep.subr.mxu0 0.0
        %1300 = vmatpush1.msra.mxu0 0.0
        %1301 = vmatprep.subr.mxu0 0.0
        %1302 = vmatpush1.msra.mxu0 0.0
        %1303 = vmatprep.subr.mxu0 0.0
        %1304 = vmatpush1.msra.mxu0 0.0
        %1305 = vmatprep.subr.mxu0 0.0
        %1306 = vmatpush1.msra.mxu0 0.0
        %1307 = vmatprep.subr.mxu0 0.0
        %1308 = vmatpush1.msra.mxu0 0.0
        %1309 = vmatprep.subr.mxu0 0.0
        %1310 = vmatpush1.msra.mxu0 0.0
        %1311 = vmatprep.subr.mxu0 0.0
        %1312 = vmatpush1.msra.mxu0 0.0
        %1313 = vmatprep.mubr.f32.mxu0 0.0
        %1314 = vmatmul.mubr.f32.gmra.mrb[0].mxu0 %v1000
        %v1315 = vpop.f32.mrb[0].mxu0
        %v1316 = vadd.f32 %v961, %v1315
        %v1317 = vpop.f32.mrb[0].mxu0
        %v1318 = vadd.f32 %v961, %v1317
        %1319 = vmatprep.mubr.f32.mxu0 0.0
        %1320 = vmatmul.mubr.f32.gmra.mrb[0].mxu0 %v1003
        %v1321 = vpop.f32.mrb[0].mxu0
        %v1322 = vadd.f32 %v966, %v1321
        %v1323 = vpop.f32.mrb[0].mxu0
        %v1324 = vadd.f32 %v966, %v1323
        %1325 = vmatprep.mubr.f32.mxu0 0.0
        %1326 = vmatmul.mubr.f32.gmra.mrb[0].mxu0 %v1006
        %v1327 = vpop.f32.mrb[0].mxu0
        %v1328 = vadd.f32 %v971, %v1327
        %v1329 = vpop.f32.mrb[0].mxu0
        %v1330 = vadd.f32 %v971, %v1329
        %1331 = vmatprep.mubr.f32.mxu0 0.0
        %1332 = vmatmul.mubr.f32.gmra.mrb[0].mxu0 %v1009
        %v1333 = vpop.f32.mrb[0].mxu0
        %v1334 = vadd.f32 %v976, %v1333
        %v1335 = vpop.f32.mrb[0].mxu0
        %v1336 = vadd.f32 %v976, %v1335
        %1337 = vmatprep.mubr.f32.mxu0 0.0
        %1338 = vmatmul.mubr.f32.gmra.mrb[0].mxu0 %v1012
        %v1339 = vpop.f32.mrb[0].mxu0
        %v1340 = vadd.f32 %v981, %v1339
        %v1341 = vpop.f32.mrb[0].mxu0
        %v1342 = vadd.f32 %v981, %v1341
        %1343 = vmatprep.mubr.f32.mxu0 0.0
        %1344 = vmatmul.mubr.f32.gmra.mrb[0].mxu0 %v1015
        %v1345 = vpop.f32.mrb[0].mxu0
        %v1346 = vadd.f32 %v986, %v1345
        %v1347 = vpop.f32.mrb[0].mxu0
        %v1348 = vadd.f32 %v986, %v1347
        %1349 = vmatprep.mubr.f32.mxu0 0.0
        %1350 = vmatmul.mubr.f32.gmra.mrb[0].mxu0 %v1018
        %v1351 = vpop.f32.mrb[0].mxu0
        %v1352 = vadd.f32 %v991, %v1351
        %v1353 = vpop.f32.mrb[0].mxu0
        %v1354 = vadd.f32 %v991, %v1353
        %1355 = vmatprep.mubr.f32.mxu0 0.0
        %1356 = vmatmul.mubr.f32.gmra.mrb[0].mxu0 %v1021
        %v1357 = vpop.f32.mrb[0].mxu0
        %v1358 = vadd.f32 %v996, %v1357
        %v1359 = vpop.f32.mrb[0].mxu0
        %v1360 = vadd.f32 %v996, %v1359
        %1361 = vdwg.mxu0
        %1362 = vmatprep.subr.mxu0 %v885
        %1363 = vmatpush1.msra.mxu0 %v884
        %1364 = vmatprep.subr.mxu0 %v893
        %1365 = vmatpush1.msra.mxu0 %v892
        %1366 = vmatprep.subr.mxu0 %v901
        %1367 = vmatpush1.msra.mxu0 %v900
        %1368 = vmatprep.subr.mxu0 %v909
        %1369 = vmatpush1.msra.mxu0 %v908
        %1370 = vmatprep.subr.mxu0 %v917
        %1371 = vmatpush1.msra.mxu0 %v916
        %1372 = vmatprep.subr.mxu0 %v925
        %1373 = vmatpush1.msra.mxu0 %v924
        %1374 = vmatprep.subr.mxu0 %v933
        %1375 = vmatpush1.msra.mxu0 %v932
        %1376 = vmatprep.subr.mxu0 %v941
        %1377 = vmatpush1.msra.mxu0 %v940
        %1378 = vmatprep.subr.mxu0 0.0
        %1379 = vmatpush1.msra.mxu0 0.0
        %1380 = vmatprep.subr.mxu0 0.0
        %1381 = vmatpush1.msra.mxu0 0.0
        %1382 = vmatprep.subr.mxu0 0.0
        %1383 = vmatpush1.msra.mxu0 0.0
        %1384 = vmatprep.subr.mxu0 0.0
        %1385 = vmatpush1.msra.mxu0 0.0
        %1386 = vmatprep.subr.mxu0 0.0
        %1387 = vmatpush1.msra.mxu0 0.0
        %1388 = vmatprep.subr.mxu0 0.0
        %1389 = vmatpush1.msra.mxu0 0.0
        %1390 = vmatprep.subr.mxu0 0.0
        %1391 = vmatpush1.msra.mxu0 0.0
        %1392 = vmatprep.subr.mxu0 0.0
        %1393 = vmatpush1.msra.mxu0 0.0
        %1394 = vmatprep.subr.mxu0 0.0
        %1395 = vmatpush1.msra.mxu0 0.0
        %1396 = vmatprep.subr.mxu0 0.0
        %1397 = vmatpush1.msra.mxu0 0.0
        %1398 = vmatprep.subr.mxu0 0.0
        %1399 = vmatpush1.msra.mxu0 0.0
        %1400 = vmatprep.subr.mxu0 0.0
        %1401 = vmatpush1.msra.mxu0 0.0
        %1402 = vmatprep.subr.mxu0 0.0
        %1403 = vmatpush1.msra.mxu0 0.0
        %1404 = vmatprep.subr.mxu0 0.0
        %1405 = vmatpush1.msra.mxu0 0.0
        %1406 = vmatprep.subr.mxu0 0.0
        %1407 = vmatpush1.msra.mxu0 0.0
        %1408 = vmatprep.subr.mxu0 0.0
        %1409 = vmatpush1.msra.mxu0 0.0
        %1410 = vmatprep.subr.mxu0 0.0
        %1411 = vmatpush1.msra.mxu0 0.0
        %1412 = vmatprep.subr.mxu0 0.0
        %1413 = vmatpush1.msra.mxu0 0.0
        %1414 = vmatprep.subr.mxu0 0.0
        %1415 = vmatpush1.msra.mxu0 0.0
        %1416 = vmatprep.subr.mxu0 0.0
        %1417 = vmatpush1.msra.mxu0 0.0
        %1418 = vmatprep.subr.mxu0 0.0
        %1419 = vmatpush1.msra.mxu0 0.0
        %1420 = vmatprep.subr.mxu0 0.0
        %1421 = vmatpush1.msra.mxu0 0.0
        %1422 = vmatprep.subr.mxu0 0.0
        %1423 = vmatpush1.msra.mxu0 0.0
        %1424 = vmatprep.subr.mxu0 0.0
        %1425 = vmatpush1.msra.mxu0 0.0
        %1426 = vmatprep.mubr.f32.mxu0 0.0
        %1427 = vmatmul.mubr.f32.gmra.mrb[0].mxu0 %v1000
        %v1428 = vpop.f32.mrb[0].mxu0
        %v1429 = vadd.f32 %v961, %v1428
        %v1430 = vpop.f32.mrb[0].mxu0
        %v1431 = vadd.f32 %v961, %v1430
        %1432 = vmatprep.mubr.f32.mxu0 0.0
        %1433 = vmatmul.mubr.f32.gmra.mrb[0].mxu0 %v1003
        %v1434 = vpop.f32.mrb[0].mxu0
        %v1435 = vadd.f32 %v966, %v1434
        %v1436 = vpop.f32.mrb[0].mxu0
        %v1437 = vadd.f32 %v966, %v1436
        %1438 = vmatprep.mubr.f32.mxu0 0.0
        %1439 = vmatmul.mubr.f32.gmra.mrb[0].mxu0 %v1006
        %v1440 = vpop.f32.mrb[0].mxu0
        %v1441 = vadd.f32 %v971, %v1440
        %v1442 = vpop.f32.mrb[0].mxu0
        %v1443 = vadd.f32 %v971, %v1442
        %1444 = vmatprep.mubr.f32.mxu0 0.0
        %1445 = vmatmul.mubr.f32.gmra.mrb[0].mxu0 %v1009
        %v1446 = vpop.f32.mrb[0].mxu0
        %v1447 = vadd.f32 %v976, %v1446
        %v1448 = vpop.f32.mrb[0].mxu0
        %v1449 = vadd.f32 %v976, %v1448
        %1450 = vmatprep.mubr.f32.mxu0 0.0
        %1451 = vmatmul.mubr.f32.gmra.mrb[0].mxu0 %v1012
        %v1452 = vpop.f32.mrb[0].mxu0
        %v1453 = vadd.f32 %v981, %v1452
        %v1454 = vpop.f32.mrb[0].mxu0
        %v1455 = vadd.f32 %v981, %v1454
        %1456 = vmatprep.mubr.f32.mxu0 0.0
        %1457 = vmatmul.mubr.f32.gmra.mrb[0].mxu0 %v1015
        %v1458 = vpop.f32.mrb[0].mxu0
        %v1459 = vadd.f32 %v986, %v1458
        %v1460 = vpop.f32.mrb[0].mxu0
        %v1461 = vadd.f32 %v986, %v1460
        %1462 = vmatprep.mubr.f32.mxu0 0.0
        %1463 = vmatmul.mubr.f32.gmra.mrb[0].mxu0 %v1018
        %v1464 = vpop.f32.mrb[0].mxu0
        %v1465 = vadd.f32 %v991, %v1464
        %v1466 = vpop.f32.mrb[0].mxu0
        %v1467 = vadd.f32 %v991, %v1466
        %1468 = vmatprep.mubr.f32.mxu0 0.0
        %1469 = vmatmul.mubr.f32.gmra.mrb[0].mxu0 %v1021
        %v1470 = vpop.f32.mrb[0].mxu0
        %v1471 = vadd.f32 %v996, %v1470
        %v1472 = vpop.f32.mrb[0].mxu0
        %v1473 = vadd.f32 %v996, %v1472
        %1474 = vdwg.mxu0
        %v1475 = vtanh.pop %v1090
        %v1476 = vtanh.pop %v1092
        %v1477 = vtanh.pop %v1203
        %v1478 = vtanh.pop %v1205
        %v1479 = vtanh.pop %v1316
        %v1480 = vtanh.pop %v1318
        %v1481 = vtanh.pop %v1429
        %v1482 = vtanh.pop %v1431
        %v1483 = vtanh.pop %v1096
        %v1484 = vtanh.pop %v1098
        %v1485 = vtanh.pop %v1209
        %v1486 = vtanh.pop %v1211
        %v1487 = vtanh.pop %v1322
        %v1488 = vtanh.pop %v1324
        %v1489 = vtanh.pop %v1435
        %v1490 = vtanh.pop %v1437
        %v1491 = vtanh.pop %v1102
        %v1492 = vtanh.pop %v1104
        %v1493 = vtanh.pop %v1215
        %v1494 = vtanh.pop %v1217
        %v1495 = vtanh.pop %v1328
        %v1496 = vtanh.pop %v1330
        %v1497 = vtanh.pop %v1441
        %v1498 = vtanh.pop %v1443
        %v1499 = vtanh.pop %v1108
        %v1500 = vtanh.pop %v1110
        %v1501 = vtanh.pop %v1221
        %v1502 = vtanh.pop %v1223
        %v1503 = vtanh.pop %v1334
        %v1504 = vtanh.pop %v1336
        %v1505 = vtanh.pop %v1447
        %v1506 = vtanh.pop %v1449
        %v1507 = vtanh.pop %v1114
        %v1508 = vtanh.pop %v1116
        %v1509 = vtanh.pop %v1227
        %v1510 = vtanh.pop %v1229
        %v1511 = vtanh.pop %v1340
        %v1512 = vtanh.pop %v1342
        %v1513 = vtanh.pop %v1453
        %v1514 = vtanh.pop %v1455
        %v1515 = vtanh.pop %v1120
        %v1516 = vtanh.pop %v1122
        %v1517 = vtanh.pop %v1233
        %v1518 = vtanh.pop %v1235
        %v1519 = vtanh.pop %v1346
        %v1520 = vtanh.pop %v1348
        %v1521 = vtanh.pop %v1459
        %v1522 = vtanh.pop %v1461
        %v1523 = vtanh.pop %v1126
        %v1524 = vtanh.pop %v1128
        %v1525 = vtanh.pop %v1239
        %v1526 = vtanh.pop %v1241
        %v1527 = vtanh.pop %v1352
        %v1528 = vtanh.pop %v1354
        %v1529 = vtanh.pop %v1465
        %v1530 = vtanh.pop %v1467
        %v1531 = vtanh.pop %v1132
        %v1532 = vtanh.pop %v1134
        %v1533 = vtanh.pop %v1245
        %v1534 = vtanh.pop %v1247
        %v1535 = vtanh.pop %v1358
        %v1536 = vtanh.pop %v1360
        %v1537 = vtanh.pop %v1471
        %v1538 = vtanh.pop %v1473
        %v1539 = vld [vmem:[%s5] sm:$0xff]
        %v1540 = vld [vmem:[%s6] sm:$0xff]
        %1542 = vset.pattern.permute.xlu0 0
        %1543 = vperm.xlu0 %1542, %v1540
        %v1544 = vpop.permute.xlu0 %1543
        %v1547 = vsel %vm998, %v1539, 0
        %1549 = vmatprep.subr.mxu0 %v1476
        %1550 = vmatpush1.msra.mxu0 %v1475
        %1551 = vmatprep.subr.mxu0 %v1484
        %1552 = vmatpush1.msra.mxu0 %v1483
        %1553 = vmatprep.subr.mxu0 %v1492
        %1554 = vmatpush1.msra.mxu0 %v1491
        %1555 = vmatprep.subr.mxu0 %v1500
        %1556 = vmatpush1.msra.mxu0 %v1499
        %1557 = vmatprep.subr.mxu0 %v1508
        %1558 = vmatpush1.msra.mxu0 %v1507
        %1559 = vmatprep.subr.mxu0 %v1516
        %1560 = vmatpush1.msra.mxu0 %v1515
        %1561 = vmatprep.subr.mxu0 %v1524
        %1562 = vmatpush1.msra.mxu0 %v1523
        %1563 = vmatprep.subr.mxu0 %v1532
        %1564 = vmatpush1.msra.mxu0 %v1531
        %1565 = vmatprep.subr.mxu0 0.0
        %1566 = vmatpush1.msra.mxu0 0.0
        %1567 = vmatprep.subr.mxu0 0.0
        %1568 = vmatpush1.msra.mxu0 0.0
        %1569 = vmatprep.subr.mxu0 0.0
        %1570 = vmatpush1.msra.mxu0 0.0
        %1571 = vmatprep.subr.mxu0 0.0
        %1572 = vmatpush1.msra.mxu0 0.0
        %1573 = vmatprep.subr.mxu0 0.0
        %1574 = vmatpush1.msra.mxu0 0.0
        %1575 = vmatprep.subr.mxu0 0.0
        %1576 = vmatpush1.msra.mxu0 0.0
        %1577 = vmatprep.subr.mxu0 0.0
        %1578 = vmatpush1.msra.mxu0 0.0
        %1579 = vmatprep.subr.mxu0 0.0
        %1580 = vmatpush1.msra.mxu0 0.0
        %1581 = vmatprep.subr.mxu0 0.0
        %1582 = vmatpush1.msra.mxu0 0.0
        %1583 = vmatprep.subr.mxu0 0.0
        %1584 = vmatpush1.msra.mxu0 0.0
        %1585 = vmatprep.subr.mxu0 0.0
        %1586 = vmatpush1.msra.mxu0 0.0
        %1587 = vmatprep.subr.mxu0 0.0
        %1588 = vmatpush1.msra.mxu0 0.0
        %1589 = vmatprep.subr.mxu0 0.0
        %1590 = vmatpush1.msra.mxu0 0.0
        %1591 = vmatprep.subr.mxu0 0.0
        %1592 = vmatpush1.msra.mxu0 0.0
        %1593 = vmatprep.subr.mxu0 0.0
        %1594 = vmatpush1.msra.mxu0 0.0
        %1595 = vmatprep.subr.mxu0 0.0
        %1596 = vmatpush1.msra.mxu0 0.0
        %1597 = vmatprep.subr.mxu0 0.0
        %1598 = vmatpush1.msra.mxu0 0.0
        %1599 = vmatprep.subr.mxu0 0.0
        %1600 = vmatpush1.msra.mxu0 0.0
        %1601 = vmatprep.subr.mxu0 0.0
        %1602 = vmatpush1.msra.mxu0 0.0
        %1603 = vmatprep.subr.mxu0 0.0
        %1604 = vmatpush1.msra.mxu0 0.0
        %1605 = vmatprep.subr.mxu0 0.0
        %1606 = vmatpush1.msra.mxu0 0.0
        %1607 = vmatprep.subr.mxu0 0.0
        %1608 = vmatpush1.msra.mxu0 0.0
        %1609 = vmatprep.subr.mxu0 0.0
        %1610 = vmatpush1.msra.mxu0 0.0
        %1611 = vmatprep.subr.mxu0 0.0
        %1612 = vmatpush1.msra.mxu0 0.0
        %1613 = vmatprep.mubr.f32.mxu0 0.0
        %1614 = vmatmul.mubr.f32.gmra.mrb[0].mxu0 %v1547
        %v1615 = vpop.f32.mrb[0].mxu0
        %v1616 = vadd.f32 %v1544, %v1615
        %v1617 = vpop.f32.mrb[0].mxu0
        %v1618 = vadd.f32 %v1544, %v1617
        %1619 = vdwg.mxu0
        %1620 = vmatprep.subr.mxu0 %v1478
        %1621 = vmatpush1.msra.mxu0 %v1477
        %1622 = vmatprep.subr.mxu0 %v1486
        %1623 = vmatpush1.msra.mxu0 %v1485
        %1624 = vmatprep.subr.mxu0 %v1494
        %1625 = vmatpush1.msra.mxu0 %v1493
        %1626 = vmatprep.subr.mxu0 %v1502
        %1627 = vmatpush1.msra.mxu0 %v1501
        %1628 = vmatprep.subr.mxu0 %v1510
        %1629 = vmatpush1.msra.mxu0 %v1509
        %1630 = vmatprep.subr.mxu0 %v1518
        %1631 = vmatpush1.msra.mxu0 %v1517
        %1632 = vmatprep.subr.mxu0 %v1526
        %1633 = vmatpush1.msra.mxu0 %v1525
        %1634 = vmatprep.subr.mxu0 %v1534
        %1635 = vmatpush1.msra.mxu0 %v1533
        %1636 = vmatprep.subr.mxu0 0.0
        %1637 = vmatpush1.msra.mxu0 0.0
        %1638 = vmatprep.subr.mxu0 0.0
        %1639 = vmatpush1.msra.mxu0 0.0
        %1640 = vmatprep.subr.mxu0 0.0
        %1641 = vmatpush1.msra.mxu0 0.0
        %1642 = vmatprep.subr.mxu0 0.0
        %1643 = vmatpush1.msra.mxu0 0.0
        %1644 = vmatprep.subr.mxu0 0.0
        %1645 = vmatpush1.msra.mxu0 0.0
        %1646 = vmatprep.subr.mxu0 0.0
        %1647 = vmatpush1.msra.mxu0 0.0
        %1648 = vmatprep.subr.mxu0 0.0
        %1649 = vmatpush1.msra.mxu0 0.0
        %1650 = vmatprep.subr.mxu0 0.0
        %1651 = vmatpush1.msra.mxu0 0.0
        %1652 = vmatprep.subr.mxu0 0.0
        %1653 = vmatpush1.msra.mxu0 0.0
        %1654 = vmatprep.subr.mxu0 0.0
        %1655 = vmatpush1.msra.mxu0 0.0
        %1656 = vmatprep.subr.mxu0 0.0
        %1657 = vmatpush1.msra.mxu0 0.0
        %1658 = vmatprep.subr.mxu0 0.0
        %1659 = vmatpush1.msra.mxu0 0.0
        %1660 = vmatprep.subr.mxu0 0.0
        %1661 = vmatpush1.msra.mxu0 0.0
        %1662 = vmatprep.subr.mxu0 0.0
        %1663 = vmatpush1.msra.mxu0 0.0
        %1664 = vmatprep.subr.mxu0 0.0
        %1665 = vmatpush1.msra.mxu0 0.0
        %1666 = vmatprep.subr.mxu0 0.0
        %1667 = vmatpush1.msra.mxu0 0.0
        %1668 = vmatprep.subr.mxu0 0.0
        %1669 = vmatpush1.msra.mxu0 0.0
        %1670 = vmatprep.subr.mxu0 0.0
        %1671 = vmatpush1.msra.mxu0 0.0
        %1672 = vmatprep.subr.mxu0 0.0
        %1673 = vmatpush1.msra.mxu0 0.0
        %1674 = vmatprep.subr.mxu0 0.0
        %1675 = vmatpush1.msra.mxu0 0.0
        %1676 = vmatprep.subr.mxu0 0.0
        %1677 = vmatpush1.msra.mxu0 0.0
        %1678 = vmatprep.subr.mxu0 0.0
        %1679 = vmatpush1.msra.mxu0 0.0
        %1680 = vmatprep.subr.mxu0 0.0
        %1681 = vmatpush1.msra.mxu0 0.0
        %1682 = vmatprep.subr.mxu0 0.0
        %1683 = vmatpush1.msra.mxu0 0.0
        %1684 = vmatprep.mubr.f32.mxu0 0.0
        %1685 = vmatmul.mubr.f32.gmra.mrb[0].mxu0 %v1547
        %v1686 = vpop.f32.mrb[0].mxu0
        %v1687 = vadd.f32 %v1544, %v1686
        %v1688 = vpop.f32.mrb[0].mxu0
        %v1689 = vadd.f32 %v1544, %v1688
        %1690 = vdwg.mxu0
        %1691 = vmatprep.subr.mxu0 %v1480
        %1692 = vmatpush1.msra.mxu0 %v1479
        %1693 = vmatprep.subr.mxu0 %v1488
        %1694 = vmatpush1.msra.mxu0 %v1487
        %1695 = vmatprep.subr.mxu0 %v1496
        %1696 = vmatpush1.msra.mxu0 %v1495
        %1697 = vmatprep.subr.mxu0 %v1504
        %1698 = vmatpush1.msra.mxu0 %v1503
        %1699 = vmatprep.subr.mxu0 %v1512
        %1700 = vmatpush1.msra.mxu0 %v1511
        %1701 = vmatprep.subr.mxu0 %v1520
        %1702 = vmatpush1.msra.mxu0 %v1519
        %1703 = vmatprep.subr.mxu0 %v1528
        %1704 = vmatpush1.msra.mxu0 %v1527
        %1705 = vmatprep.subr.mxu0 %v1536
        %1706 = vmatpush1.msra.mxu0 %v1535
        %1707 = vmatprep.subr.mxu0 0.0
        %1708 = vmatpush1.msra.mxu0 0.0
        %1709 = vmatprep.subr.mxu0 0.0
        %1710 = vmatpush1.msra.mxu0 0.0
        %1711 = vmatprep.subr.mxu0 0.0
        %1712 = vmatpush1.msra.mxu0 0.0
        %1713 = vmatprep.subr.mxu0 0.0
        %1714 = vmatpush1.msra.mxu0 0.0
        %1715 = vmatprep.subr.mxu0 0.0
        %1716 = vmatpush1.msra.mxu0 0.0
        %1717 = vmatprep.subr.mxu0 0.0
        %1718 = vmatpush1.msra.mxu0 0.0
        %1719 = vmatprep.subr.mxu0 0.0
        %1720 = vmatpush1.msra.mxu0 0.0
        %1721 = vmatprep.subr.mxu0 0.0
        %1722 = vmatpush1.msra.mxu0 0.0
        %1723 = vmatprep.subr.mxu0 0.0
        %1724 = vmatpush1.msra.mxu0 0.0
        %1725 = vmatprep.subr.mxu0 0.0
        %1726 = vmatpush1.msra.mxu0 0.0
        %1727 = vmatprep.subr.mxu0 0.0
        %1728 = vmatpush1.msra.mxu0 0.0
        %1729 = vmatprep.subr.mxu0 0.0
        %1730 = vmatpush1.msra.mxu0 0.0
        %1731 = vmatprep.subr.mxu0 0.0
        %1732 = vmatpush1.msra.mxu0 0.0
        %1733 = vmatprep.subr.mxu0 0.0
        %1734 = vmatpush1.msra.mxu0 0.0
        %1735 = vmatprep.subr.mxu0 0.0
        %1736 = vmatpush1.msra.mxu0 0.0
        %1737 = vmatprep.subr.mxu0 0.0
        %1738 = vmatpush1.msra.mxu0 0.0
        %1739 = vmatprep.subr.mxu0 0.0
        %1740 = vmatpush1.msra.mxu0 0.0
        %1741 = vmatprep.subr.mxu0 0.0
        %1742 = vmatpush1.msra.mxu0 0.0
        %1743 = vmatprep.subr.mxu0 0.0
        %1744 = vmatpush1.msra.mxu0 0.0
        %1745 = vmatprep.subr.mxu0 0.0
        %1746 = vmatpush1.msra.mxu0 0.0
        %1747 = vmatprep.subr.mxu0 0.0
        %1748 = vmatpush1.msra.mxu0 0.0
        %1749 = vmatprep.subr.mxu0 0.0
        %1750 = vmatpush1.msra.mxu0 0.0
        %1751 = vmatprep.subr.mxu0 0.0
        %1752 = vmatpush1.msra.mxu0 0.0
        %1753 = vmatprep.subr.mxu0 0.0
        %1754 = vmatpush1.msra.mxu0 0.0
        %1755 = vmatprep.mubr.f32.mxu0 0.0
        %1756 = vmatmul.mubr.f32.gmra.mrb[0].mxu0 %v1547
        %v1757 = vpop.f32.mrb[0].mxu0
        %v1758 = vadd.f32 %v1544, %v1757
        %v1759 = vpop.f32.mrb[0].mxu0
        %v1760 = vadd.f32 %v1544, %v1759
        %1761 = vdwg.mxu0
        %1762 = vmatprep.subr.mxu0 %v1482
        %1763 = vmatpush1.msra.mxu0 %v1481
        %1764 = vmatprep.subr.mxu0 %v1490
        %1765 = vmatpush1.msra.mxu0 %v1489
        %1766 = vmatprep.subr.mxu0 %v1498
        %1767 = vmatpush1.msra.mxu0 %v1497
        %1768 = vmatprep.subr.mxu0 %v1506
        %1769 = vmatpush1.msra.mxu0 %v1505
        %1770 = vmatprep.subr.mxu0 %v1514
        %1771 = vmatpush1.msra.mxu0 %v1513
        %1772 = vmatprep.subr.mxu0 %v1522
        %1773 = vmatpush1.msra.mxu0 %v1521
        %1774 = vmatprep.subr.mxu0 %v1530
        %1775 = vmatpush1.msra.mxu0 %v1529
        %1776 = vmatprep.subr.mxu0 %v1538
        %1777 = vmatpush1.msra.mxu0 %v1537
        %1778 = vmatprep.subr.mxu0 0.0
        %1779 = vmatpush1.msra.mxu0 0.0
        %1780 = vmatprep.subr.mxu0 0.0
        %1781 = vmatpush1.msra.mxu0 0.0
        %1782 = vmatprep.subr.mxu0 0.0
        %1783 = vmatpush1.msra.mxu0 0.0
        %1784 = vmatprep.subr.mxu0 0.0
        %1785 = vmatpush1.msra.mxu0 0.0
        %1786 = vmatprep.subr.mxu0 0.0
        %1787 = vmatpush1.msra.mxu0 0.0
        %1788 = vmatprep.subr.mxu0 0.0
        %1789 = vmatpush1.msra.mxu0 0.0
        %1790 = vmatprep.subr.mxu0 0.0
        %1791 = vmatpush1.msra.mxu0 0.0
        %1792 = vmatprep.subr.mxu0 0.0
        %1793 = vmatpush1.msra.mxu0 0.0
        %1794 = vmatprep.subr.mxu0 0.0
        %1795 = vmatpush1.msra.mxu0 0.0
        %1796 = vmatprep.subr.mxu0 0.0
        %1797 = vmatpush1.msra.mxu0 0.0
        %1798 = vmatprep.subr.mxu0 0.0
        %1799 = vmatpush1.msra.mxu0 0.0
        %1800 = vmatprep.subr.mxu0 0.0
        %1801 = vmatpush1.msra.mxu0 0.0
        %1802 = vmatprep.subr.mxu0 0.0
        %1803 = vmatpush1.msra.mxu0 0.0
        %1804 = vmatprep.subr.mxu0 0.0
        %1805 = vmatpush1.msra.mxu0 0.0
        %1806 = vmatprep.subr.mxu0 0.0
        %1807 = vmatpush1.msra.mxu0 0.0
        %1808 = vmatprep.subr.mxu0 0.0
        %1809 = vmatpush1.msra.mxu0 0.0
        %1810 = vmatprep.subr.mxu0 0.0
        %1811 = vmatpush1.msra.mxu0 0.0
        %1812 = vmatprep.subr.mxu0 0.0
        %1813 = vmatpush1.msra.mxu0 0.0
        %1814 = vmatprep.subr.mxu0 0.0
        %1815 = vmatpush1.msra.mxu0 0.0
        %1816 = vmatprep.subr.mxu0 0.0
        %1817 = vmatpush1.msra.mxu0 0.0
        %1818 = vmatprep.subr.mxu0 0.0
        %1819 = vmatpush1.msra.mxu0 0.0
        %1820 = vmatprep.subr.mxu0 0.0
        %1821 = vmatpush1.msra.mxu0 0.0
        %1822 = vmatprep.subr.mxu0 0.0
        %1823 = vmatpush1.msra.mxu0 0.0
        %1824 = vmatprep.subr.mxu0 0.0
        %1825 = vmatpush1.msra.mxu0 0.0
        %1826 = vmatprep.mubr.f32.mxu0 0.0
        %1827 = vmatmul.mubr.f32.gmra.mrb[0].mxu0 %v1547
        %v1828 = vpop.f32.mrb[0].mxu0
        %v1829 = vadd.f32 %v1544, %v1828
        %v1830 = vpop.f32.mrb[0].mxu0
        %v1831 = vadd.f32 %v1544, %v1830
        %1832 = vdwg.mxu0
        %v1833 = vmul.f32 %v1616, %v1616
        %v1834 = vmul.f32 %v1618, %v1618
        %v1835 = vmul.f32 %v1687, %v1687
        %v1836 = vmul.f32 %v1689, %v1689
        %v1837 = vmul.f32 %v1758, %v1758
        %v1838 = vmul.f32 %v1760, %v1760
        %v1839 = vmul.f32 %v1829, %v1829
        %v1840 = vmul.f32 %v1831, %v1831
        %v1841 = vrot.slane %v1833, 4
        %v1842 = vadd.f32 %v1833, %v1841
        %v1843 = vrot.slane %v1842, 2
        %v1844 = vadd.f32 %v1842, %v1843
        %v1845 = vrot.slane %v1844, 1
        %v1846 = vadd.f32 %v1844, %v1845
        %v1847 = vrot.slane %v1834, 4
        %v1848 = vadd.f32 %v1834, %v1847
        %v1849 = vrot.slane %v1848, 2
        %v1850 = vadd.f32 %v1848, %v1849
        %v1851 = vrot.slane %v1850, 1
        %v1852 = vadd.f32 %v1850, %v1851
        %v1853 = vrot.slane %v1835, 4
        %v1854 = vadd.f32 %v1835, %v1853
        %v1855 = vrot.slane %v1854, 2
        %v1856 = vadd.f32 %v1854, %v1855
        %v1857 = vrot.slane %v1856, 1
        %v1858 = vadd.f32 %v1856, %v1857
        %v1859 = vrot.slane %v1836, 4
        %v1860 = vadd.f32 %v1836, %v1859
        %v1861 = vrot.slane %v1860, 2
        %v1862 = vadd.f32 %v1860, %v1861
        %v1863 = vrot.slane %v1862, 1
        %v1864 = vadd.f32 %v1862, %v1863
        %v1865 = vrot.slane %v1837, 4
        %v1866 = vadd.f32 %v1837, %v1865
        %v1867 = vrot.slane %v1866, 2
        %v1868 = vadd.f32 %v1866, %v1867
        %v1869 = vrot.slane %v1868, 1
        %v1870 = vadd.f32 %v1868, %v1869
        %v1871 = vrot.slane %v1838, 4
        %v1872 = vadd.f32 %v1838, %v1871
        %v1873 = vrot.slane %v1872, 2
        %v1874 = vadd.f32 %v1872, %v1873
        %v1875 = vrot.slane %v1874, 1
        %v1876 = vadd.f32 %v1874, %v1875
        %v1877 = vrot.slane %v1839, 4
        %v1878 = vadd.f32 %v1839, %v1877
        %v1879 = vrot.slane %v1878, 2
        %v1880 = vadd.f32 %v1878, %v1879
        %v1881 = vrot.slane %v1880, 1
        %v1882 = vadd.f32 %v1880, %v1881
        %v1883 = vrot.slane %v1840, 4
        %v1884 = vadd.f32 %v1840, %v1883
        %v1885 = vrot.slane %v1884, 2
        %v1886 = vadd.f32 %v1884, %v1885
        %v1887 = vrot.slane %v1886, 1
        %v1888 = vadd.f32 %v1886, %v1887
        %v1889 = vrsqrt.pop %v1846
        %v1890 = vmul.f32 %v1846, %v1889
        %vm1891 = vcmp.eq.f32.partialorder %v1846, inf
        %v1892 = vsel %vm1891, %v1846, %v1890
        %vm1893 = vcmp.eq.f32.partialorder %v1846, 0.0
        %v1894 = vand.u32 %v1846, 2147483648
        %v1895 = vsel %vm1893, %v1894, %v1892
        %v1896 = vrsqrt.pop %v1852
        %v1897 = vmul.f32 %v1852, %v1896
        %vm1898 = vcmp.eq.f32.partialorder %v1852, inf
        %v1899 = vsel %vm1898, %v1852, %v1897
        %vm1900 = vcmp.eq.f32.partialorder %v1852, 0.0
        %v1901 = vand.u32 %v1852, 2147483648
        %v1902 = vsel %vm1900, %v1901, %v1899
        %v1903 = vrsqrt.pop %v1858
        %v1904 = vmul.f32 %v1858, %v1903
        %vm1905 = vcmp.eq.f32.partialorder %v1858, inf
        %v1906 = vsel %vm1905, %v1858, %v1904
        %vm1907 = vcmp.eq.f32.partialorder %v1858, 0.0
        %v1908 = vand.u32 %v1858, 2147483648
        %v1909 = vsel %vm1907, %v1908, %v1906
        %v1910 = vrsqrt.pop %v1864
        %v1911 = vmul.f32 %v1864, %v1910
        %vm1912 = vcmp.eq.f32.partialorder %v1864, inf
        %v1913 = vsel %vm1912, %v1864, %v1911
        %vm1914 = vcmp.eq.f32.partialorder %v1864, 0.0
        %v1915 = vand.u32 %v1864, 2147483648
        %v1916 = vsel %vm1914, %v1915, %v1913
        %v1917 = vrsqrt.pop %v1870
        %v1918 = vmul.f32 %v1870, %v1917
        %vm1919 = vcmp.eq.f32.partialorder %v1870, inf
        %v1920 = vsel %vm1919, %v1870, %v1918
        %vm1921 = vcmp.eq.f32.partialorder %v1870, 0.0
        %v1922 = vand.u32 %v1870, 2147483648
        %v1923 = vsel %vm1921, %v1922, %v1920
        %v1924 = vrsqrt.pop %v1876
        %v1925 = vmul.f32 %v1876, %v1924
        %vm1926 = vcmp.eq.f32.partialorder %v1876, inf
        %v1927 = vsel %vm1926, %v1876, %v1925
        %vm1928 = vcmp.eq.f32.partialorder %v1876, 0.0
        %v1929 = vand.u32 %v1876, 2147483648
        %v1930 = vsel %vm1928, %v1929, %v1927
        %v1931 = vrsqrt.pop %v1882
        %v1932 = vmul.f32 %v1882, %v1931
        %vm1933 = vcmp.eq.f32.partialorder %v1882, inf
        %v1934 = vsel %vm1933, %v1882, %v1932
        %vm1935 = vcmp.eq.f32.partialorder %v1882, 0.0
        %v1936 = vand.u32 %v1882, 2147483648
        %v1937 = vsel %vm1935, %v1936, %v1934
        %v1938 = vrsqrt.pop %v1888
        %v1939 = vmul.f32 %v1888, %v1938
        %vm1940 = vcmp.eq.f32.partialorder %v1888, inf
        %v1941 = vsel %vm1940, %v1888, %v1939
        %vm1942 = vcmp.eq.f32.partialorder %v1888, 0.0
        %v1943 = vand.u32 %v1888, 2147483648
        %v1944 = vsel %vm1942, %v1943, %v1941
        %v1953 = vcombine.low %v1895, %v1902
        %v1954 = vcombine.low %v1909, %v1916
        %v1955 = vcombine.low %v1923, %v1930
        %v1956 = vcombine.low %v1937, %v1944
        %v1958 = vunpack.c.l.s4 1966171168
        %v1959 = vunpack.c.0.s8 %v1958
        %v1960 = vlaneseq
        %v1961 = vshrl.u32 %v1960, 7
        %v1962 = vsub.s32 %v1959, %v1961
        %v1963 = vrot.slane %v1953, %v1962
        %v1965 = vunpack.c.l.s4 1966171168
        %v1966 = vunpack.c.0.s8 %v1965
        %v1967 = vlaneseq
        %v1968 = vshrl.u32 %v1967, 7
        %v1969 = vsub.s32 %v1966, %v1968
        %v1970 = vrot.slane %v1954, %v1969
        %v1972 = vunpack.c.l.s4 1966171168
        %v1973 = vunpack.c.0.s8 %v1972
        %v1974 = vlaneseq
        %v1975 = vshrl.u32 %v1974, 7
        %v1976 = vsub.s32 %v1973, %v1975
        %v1977 = vrot.slane %v1955, %v1976
        %v1979 = vunpack.c.l.s4 1966171168
        %v1980 = vunpack.c.0.s8 %v1979
        %v1981 = vlaneseq
        %v1982 = vshrl.u32 %v1981, 7
        %v1983 = vsub.s32 %v1980, %v1982
        %v1984 = vrot.slane %v1956, %v1983
        %v1985 = vcombine.low %v1963, %v1970
        %v1986 = vcombine.low %v1977, %v1984
        %v1988 = vunpack.c.l.s4 1966171168
        %v1989 = vunpack.c.0.s8 %v1988
        %v1990 = vlaneseq
        %v1991 = vshrl.u32 %v1990, 7
        %v1992 = vsub.s32 %v1989, %v1991
        %v1993 = vrot.slane %v1985, %v1992
        %v1995 = vunpack.c.l.s4 1966171168
        %v1996 = vunpack.c.0.s8 %v1995
        %v1997 = vlaneseq
        %v1998 = vshrl.u32 %v1997, 7
        %v1999 = vsub.s32 %v1996, %v1998
        %v2000 = vrot.slane %v1986, %v1999
        %v2001 = vcombine.low %v1993, %v2000
        %2003 = vst [vmem:[%s326] sm:$0xff] %v2001
        %s2004 = sand.u32 %s181, 1
        %s2005 = scalar_lea.sflag [#allocation4], %s2004
        %s2006 = sand.u32 %s181, 1
        %s2007 = smul.addr %s2006, 8
        %s2008 = scalar_lea.vmem [#allocation3], %s2007
        // Predicated region
        $region72: #{rnd_forward.1} parent=66 // pred_check
          %p2009 = pneg %p191
        $region73: #{rnd_forward.1} parent=66 // pred_check_branch
          %2011 = sbr.rel (%p2009) target = $region75
        $region74: #{rnd_forward.1} parent=66 // pred_region
          %s2012 = smul.u32 8, %s21
          %s2014 = ssub.s32 128, 128
          %2015 = vsyncadd %s2005, %s2014
          %s2016 = smul.addr %s2012, 16
          %s2017 = scalar_lea.hbm %s7, %s2016
          %s2019 = sshll.u32 %s2008, 4
          %s2020 = int_to_ptr.vmem [resolvable:$true] %s2019
          %2022 = dma.vmem_to_hbm [thread:$0]  %s2020, 128, %s2017, %s2005
        $region75: #{rnd_forward.1} parent=66 // pred_fallthru
          _
      $region67: #{rnd_forward.1} parent=5 // pred_fallthru
        _
      %p2023 = scmp.le.s32.totalorder 2, %s16
      // Predicated region
      $region76: #{rnd_forward.1} parent=5 // pred_check
        %p2024 = pneg %p2023
      $region77: #{rnd_forward.1} parent=5 // pred_check_branch
        %2026 = sbr.rel (%p2024) target = $region79
      $region78: #{rnd_forward.1} parent=5 // pred_region
        %s2027 = ssub.s32 %s16, 2
        // Predicated region
        $region80: #{rnd_forward.1} parent=78 // pred_check
          %p2028 = pneg %p197
        $region81: #{rnd_forward.1} parent=78 // pred_check_branch
          %2030 = sbr.rel (%p2028) target = $region83
        $region82: #{rnd_forward.1} parent=78 // pred_region
          %s2031 = sand.u32 %s182, 1
          %s2032 = scalar_lea.sflag [#allocation4], %s2031
          %s2033 = sand.u32 %s182, 1
          %s2034 = smul.addr %s2033, 8
          %s2035 = scalar_lea.vmem [#allocation3], %s2034
          %2036 = dma.done %s2032, 128
        $region83: #{rnd_forward.1} parent=78 // pred_fallthru
          _
      $region79: #{rnd_forward.1} parent=5 // pred_fallthru
        _
    $region6: #{rnd_forward.1} parent=1 // loop_footer
      %s20 = sadd.s32 1, %s16
    $region7: #{rnd_forward.1} parent=1 // loop_footer_branch
      %15 = sbr.rel target = $region3
    $region8: #{rnd_forward.1} parent=1 // loop_exit
      _
    %2037 = vsyncpa [#allocation4], 1
    %s2038 = scalar_lea.sflag [#allocation4], 1
    %2039 = vsyncpa %s2038, 1

</llo_original>
